<compile_context>
chip_gen: v7x
topology: tpu7x:2x2x1
jax: 0.10.0
libtpu: 0.0.40
codegen_flags: <defaults>
</compile_context>

<pallas_src>
import jax
import jax.numpy as jnp
from jax.experimental import pallas as pl
from jax.experimental.pallas import tpu as pltpu

NUM_CLASSES = 10


# ----------------------------------------------------------------------------
# Fused kernel, one grid step per filled local model g:
#   logits       = stim @ [W_global ; W_local_g]^T + [b_global ; b_local_g]
#   p1, p2       = softmax of the two lane-halves
#   RDM_m[i,j]   = cosine_similarity(p_m[i], p_m[j])   (via normalized gram)
#   rc_out[g]    = corr2(RDM_1, RDM_2)
#   (step 0 only) acc_out[0] = #{argmax(test @ W_global^T + b_global) == label}
# ----------------------------------------------------------------------------
def _server_fused_kernel(stim_ref, wpair_ref, bpair_ref, test_ref, lab_ref,
                         rc_ref, acc_ref):
    c = NUM_CLASSES
    x = stim_ref[...]                       # (N, D) bf16, resident across the grid
    wp = wpair_ref[0]                       # (2C, D) bf16, per-model block
    bp = bpair_ref[0]                       # (1, 2C) f32

    # One K=3072 MXU stream for both heads (global + local), f32 accumulation.
    logits = jax.lax.dot_general(
        x, wp, (((1,), (1,)), ((), ())), preferred_element_type=jnp.float32,
    ) + bp                                  # (N, 2C)

    def softmax(z):
        m = jnp.max(z, axis=-1, keepdims=True)
        e = jnp.exp(z - m)
        return e / jnp.sum(e, axis=-1, keepdims=True)

    def unit_rows(p):
        # cosine-similarity normalization; eps clamp matches torch (eps=1e-8).
        nrm = jnp.sqrt(jnp.sum(p * p, axis=-1, keepdims=True))
        inv = pl.reciprocal(jnp.maximum(nrm, jnp.float32(1e-8)), approx=False)
        return p * inv

    p1 = unit_rows(softmax(logits[:, :c]))          # global head
    p2 = unit_rows(softmax(logits[:, c:2 * c]))     # local head

    # RDM = normalized gram (no K=1 denominator matmul, no NxN divide).
    r1 = jax.lax.dot_general(p1, p1, (((1,), (1,)), ((), ())),
                             preferred_element_type=jnp.float32)   # (N, N)
    r2 = jax.lax.dot_general(p2, p2, (((1,), (1,)), ((), ())),
                             preferred_element_type=jnp.float32)

    # corr2 with the mean2 quirk: divide by dim-0 length (torch len() of 2-D tensor).
    n_rows = jnp.float32(r1.shape[0])
    a = r1 - jnp.sum(r1) / n_rows
    b = r2 - jnp.sum(r2) / n_rows
    num = jnp.sum(a * b)
    den = jnp.sqrt(jnp.sum(a * a) * jnp.sum(b * b))   # no eps, as in reference
    rc_ref[...] = jnp.broadcast_to(num / den, rc_ref.shape)

    # meta_test accuracy: global-head logits on the triggered test batch,
    # computed once (grid step 0); other acc blocks are never read.
    @pl.when(pl.program_id(0) == 0)
    def _():
        wg = wpair_ref[0, :c, :]             # (C, D) global head only
        lg = jax.lax.dot_general(
            test_ref[...], wg, (((1,), (1,)), ((), ())),
            preferred_element_type=jnp.float32,
        ) + bp[:, :c]                        # (B, C)
        row_max = jnp.max(lg, axis=-1, keepdims=True)
        col = jax.lax.broadcasted_iota(jnp.int32, lg.shape, 1)
        # first index attaining the max (torch argmax tie semantics)
        pred = jnp.min(jnp.where(lg >= row_max, col, c), axis=-1, keepdims=True)
        correct = jnp.sum((pred == lab_ref[...]).astype(jnp.int32))   # int32 count
        acc_ref[...] = jnp.broadcast_to(correct, acc_ref.shape)


def server_round_fused(stim, w_pair, b_pair, test_x, labels):
    """stim: (N, D) bf16; w_pair: (G, 2C, D) bf16; b_pair: (G, 1, 2C) f32;
    test_x: (B, D) bf16; labels: (B, 1) int32.
    Returns (rc_per_model: (G,) f32, correct_count: int32 scalar)."""
    g_models = w_pair.shape[0]
    n, d = stim.shape
    c2 = w_pair.shape[1]
    bsz = test_x.shape[0]
    const2 = lambda i: (0, 0)

    rc_out, acc_out = pl.pallas_call(
        _server_fused_kernel,
        grid=(g_models,),
        in_specs=[
            pl.BlockSpec((n, d), const2),                      # stimulus, resident
            pl.BlockSpec((1, c2, d), lambda i: (i, 0, 0)),     # per-model stacked W
            pl.BlockSpec((1, 1, c2), lambda i: (i, 0, 0)),     # per-model stacked b
            pl.BlockSpec((bsz, d), const2),                    # test batch, resident
            pl.BlockSpec((bsz, 1), const2),                    # labels, resident
        ],
        out_specs=(
            pl.BlockSpec((1, 8, 128), lambda i: (i, 0, 0)),    # RC per model
            pl.BlockSpec((1, 8, 128), lambda i: (i, 0, 0)),    # correct count (block 0)
        ),
        out_shape=(
            jax.ShapeDtypeStruct((g_models, 8, 128), jnp.float32),
            jax.ShapeDtypeStruct((g_models, 8, 128), jnp.int32),
        ),
        compiler_params=pltpu.CompilerParams(
            dimension_semantics=("parallel",)),                # v7x: 2 TCs share G
    )(stim, w_pair, b_pair, test_x, labels)

    return rc_out[:, 0, 0], acc_out[0, 0, 0]


# ----------------------------------------------------------------------------
# Glue (plain JAX): trigger stamping, flattening, deterministic params.
# ----------------------------------------------------------------------------
def server_add_trigger(images_nchw):
    # rows 27..30 inclusive, cols 27..30 inclusive, channels 0..2 set to 0
    return images_nchw.at[:, 0:3, 27:31, 27:31].set(0.0)


# TODO(synk): file I/O (torch.load), DataLoader shuffling, KMeans clustering of the
# RC vector and the federated client training loop are framework orchestration with
# no Pallas equivalent; the LeNet_TS conv backbone is undefined in the snippet and
# is replaced by a synthetic linear head.

if __name__ == "__main__":
    key = jax.random.PRNGKey(0)
    ks = jax.random.split(key, 7)

    num_classes = NUM_CLASSES
    stimulus_num = 10                     # stimulus_each_class_num * 10
    batch_size = 20                       # Server.batch_size
    num_models = 10                       # filled local models (num_clients)
    c, h, w = 3, 32, 32                   # trafficsign / CTSDB image shape
    feat = c * h * w                      # 3072

    # Stimulus images (NCHW), global head, and G local heads.  Weights are stored
    # LANE-DENSE: (num_classes, feat) with the 3072-wide feature axis on lanes;
    # activations / weights are bf16 for the MXU (f32 accumulation in-kernel).
    stimulus_x = jax.random.uniform(ks[0], (stimulus_num, c, h, w), jnp.float32)
    w_global = (jax.random.normal(ks[1], (num_classes, feat), jnp.float32)
                * 0.02).astype(jnp.bfloat16)
    b_global = (jax.random.normal(ks[2], (1, num_classes), jnp.float32) * 0.01
                ).astype(jnp.float32)
    w_locals = (jax.random.normal(ks[3], (num_models, num_classes, feat), jnp.float32)
                * 0.02).astype(jnp.bfloat16)
    b_locals = (jax.random.normal(ks[4], (num_models, 1, num_classes), jnp.float32)
                * 0.01).astype(jnp.float32)

    # Stack [global ; local_g] heads so each grid step does ONE K=3072 matmul.
    w_pair = jnp.concatenate(
        [jnp.broadcast_to(w_global[None], (num_models, num_classes, feat)), w_locals],
        axis=1)                                            # (G, 2C, D) bf16
    b_pair = jnp.concatenate(
        [jnp.broadcast_to(b_global[None], (num_models, 1, num_classes)), b_locals],
        axis=2)                                            # (G, 1, 2C) f32

    stim_flat = stimulus_x.reshape(stimulus_num, feat).astype(jnp.bfloat16)

    # meta_test inputs: triggered test batch + labels.
    test_x = jax.random.uniform(ks[5], (batch_size, c, h, w), jnp.float32)
    test_y = jax.random.randint(ks[6], (batch_size,), 0, num_classes, jnp.int32)
    test_x = server_add_trigger(test_x)
    test_flat = test_x.reshape(batch_size, feat).astype(jnp.bfloat16)

    # Whole server round (RC of every filled local model vs. the global model, plus
    # triggered-test accuracy of the global model) in ONE pallas_call.
    rc_vec, correct = server_round_fused(
        stim_flat, w_pair, b_pair, test_flat, test_y.reshape(batch_size, 1))
    acc = correct.astype(jnp.float32) / batch_size

    rc_vec = jax.block_until_ready(rc_vec)
    acc = jax.block_until_ready(acc)

    assert rc_vec.shape == (num_models,)
    assert bool(jnp.all(jnp.isfinite(rc_vec)))
    assert bool(jnp.all(jnp.abs(rc_vec) <= 1.0 + 1e-3))   # correlations in [-1, 1]
    assert bool(jnp.isfinite(acc)) and 0.0 <= float(acc) <= 1.0
    print("KERNEL_OK")
</pallas_src>

<mosaic_0001>
module attributes {stable_mosaic.version = 11 : i64} {
  func.func @_server_fused_kernel(%arg0: i32, %arg1: memref<10x3072xbf16, #tpu.memory_space<vmem>>, %arg2: memref<1x20x3072xbf16, #tpu.memory_space<vmem>>, %arg3: memref<1x1x20xf32, #tpu.memory_space<vmem>>, %arg4: memref<20x3072xbf16, #tpu.memory_space<vmem>>, %arg5: memref<20x1xi32, #tpu.memory_space<vmem>>, %arg6: memref<1x8x128xf32, #tpu.memory_space<vmem>>, %arg7: memref<1x8x128xi32, #tpu.memory_space<vmem>>) attributes {dimension_semantics = [#tpu.dimension_semantics<parallel>], iteration_bounds = array<i64: 10>, scalar_prefetch = 0 : i64, scratch_operands = 0 : i64, tpu.core_type = #tpu.core_type<tc>, window_params = [{pipeline_mode = #tpu.pipeline_mode<synchronous>, transform_indices = @transform_0, window_bounds = array<i64: 10, 3072>}, {transform_indices = @transform_1, window_bounds = array<i64: 1, 20, 3072>}, {transform_indices = @transform_2, window_bounds = array<i64: 1, 1, 20>}, {pipeline_mode = #tpu.pipeline_mode<synchronous>, transform_indices = @transform_3, window_bounds = array<i64: 20, 3072>}, {pipeline_mode = #tpu.pipeline_mode<synchronous>, transform_indices = @transform_4, window_bounds = array<i64: 20, 1>}, {transform_indices = @transform_5, window_bounds = array<i64: 1, 8, 128>}, {transform_indices = @transform_6, window_bounds = array<i64: 1, 8, 128>}]} {
    %c0 = arith.constant 0 : index
    %c0_0 = arith.constant 0 : index
    %0 = vector.load %arg1[%c0, %c0_0] : memref<10x3072xbf16, #tpu.memory_space<vmem>>, vector<10x3072xbf16>
    %c0_1 = arith.constant 0 : index
    %c0_2 = arith.constant 0 : index
    %c0_3 = arith.constant 0 : index
    %1 = vector.load %arg2[%c0_1, %c0_2, %c0_3] : memref<1x20x3072xbf16, #tpu.memory_space<vmem>>, vector<1x20x3072xbf16>
    %2 = vector.shape_cast %1 : vector<1x20x3072xbf16> to vector<20x3072xbf16>
    %c0_4 = arith.constant 0 : index
    %c0_5 = arith.constant 0 : index
    %c0_6 = arith.constant 0 : index
    %3 = vector.load %arg3[%c0_4, %c0_5, %c0_6] : memref<1x1x20xf32, #tpu.memory_space<vmem>>, vector<1x1x20xf32>
    %4 = vector.shape_cast %3 : vector<1x1x20xf32> to vector<1x20xf32>
    %cst = arith.constant dense<0.000000e+00> : vector<10x20xf32>
    %5 = tpu.matmul %0, %2, %cst {dimension_numbers = #tpu.dot_dimension_numbers<[1], [1], [0], [0], [0, 0, 1, 0], [], []>} : vector<10x3072xbf16>, vector<20x3072xbf16>, vector<10x20xf32> -> vector<10x20xf32>
    %6 = vector.broadcast %4 : vector<1x20xf32> to vector<10x20xf32>
    %7 = arith.addf %5, %6 : vector<10x20xf32>
    %8 = vector.extract_strided_slice %7 {offsets = [0, 0], sizes = [10, 10], strides = [1, 1]} : vector<10x20xf32> to vector<10x10xf32>
    %cst_7 = arith.constant dense<0xFF800000> : vector<10xf32>
    %9 = vector.multi_reduction <maximumf>, %8, %cst_7 [1] : vector<10x10xf32> to vector<10xf32>
    %10 = vector.shape_cast %9 : vector<10xf32> to vector<10x1xf32>
    %11 = vector.broadcast %10 : vector<10x1xf32> to vector<10x10xf32>
    %12 = arith.subf %8, %11 : vector<10x10xf32>
    %13 = math.exp %12 : vector<10x10xf32>
    %cst_8 = arith.constant dense<0.000000e+00> : vector<10xf32>
    %14 = vector.multi_reduction <add>, %13, %cst_8 [1] : vector<10x10xf32> to vector<10xf32>
    %15 = vector.shape_cast %14 : vector<10xf32> to vector<10x1xf32>
    %16 = vector.broadcast %15 : vector<10x1xf32> to vector<10x10xf32>
    %17 = arith.divf %13, %16 : vector<10x10xf32>
    %18 = arith.mulf %17, %17 : vector<10x10xf32>
    %cst_9 = arith.constant dense<0.000000e+00> : vector<10xf32>
    %19 = vector.multi_reduction <add>, %18, %cst_9 [1] : vector<10x10xf32> to vector<10xf32>
    %20 = vector.shape_cast %19 : vector<10xf32> to vector<10x1xf32>
    %21 = math.sqrt %20 : vector<10x1xf32>
    %cst_10 = arith.constant 9.99999993E-9 : f32
    %22 = vector.broadcast %cst_10 : f32 to vector<10x1xf32>
    %23 = arith.maximumf %21, %22 : vector<10x1xf32>
    %24 = tpu.reciprocal %23 : vector<10x1xf32> -> vector<10x1xf32>
    %25 = vector.broadcast %24 : vector<10x1xf32> to vector<10x10xf32>
    %26 = arith.mulf %17, %25 : vector<10x10xf32>
    %27 = vector.extract_strided_slice %7 {offsets = [0, 10], sizes = [10, 10], strides = [1, 1]} : vector<10x20xf32> to vector<10x10xf32>
    %cst_11 = arith.constant dense<0xFF800000> : vector<10xf32>
    %28 = vector.multi_reduction <maximumf>, %27, %cst_11 [1] : vector<10x10xf32> to vector<10xf32>
    %29 = vector.shape_cast %28 : vector<10xf32> to vector<10x1xf32>
    %30 = vector.broadcast %29 : vector<10x1xf32> to vector<10x10xf32>
    %31 = arith.subf %27, %30 : vector<10x10xf32>
    %32 = math.exp %31 : vector<10x10xf32>
    %cst_12 = arith.constant dense<0.000000e+00> : vector<10xf32>
    %33 = vector.multi_reduction <add>, %32, %cst_12 [1] : vector<10x10xf32> to vector<10xf32>
    %34 = vector.shape_cast %33 : vector<10xf32> to vector<10x1xf32>
    %35 = vector.broadcast %34 : vector<10x1xf32> to vector<10x10xf32>
    %36 = arith.divf %32, %35 : vector<10x10xf32>
    %37 = arith.mulf %36, %36 : vector<10x10xf32>
    %cst_13 = arith.constant dense<0.000000e+00> : vector<10xf32>
    %38 = vector.multi_reduction <add>, %37, %cst_13 [1] : vector<10x10xf32> to vector<10xf32>
    %39 = vector.shape_cast %38 : vector<10xf32> to vector<10x1xf32>
    %40 = math.sqrt %39 : vector<10x1xf32>
    %cst_14 = arith.constant 9.99999993E-9 : f32
    %41 = vector.broadcast %cst_14 : f32 to vector<10x1xf32>
    %42 = arith.maximumf %40, %41 : vector<10x1xf32>
    %43 = tpu.reciprocal %42 : vector<10x1xf32> -> vector<10x1xf32>
    %44 = vector.broadcast %43 : vector<10x1xf32> to vector<10x10xf32>
    %45 = arith.mulf %36, %44 : vector<10x10xf32>
    %cst_15 = arith.constant dense<0.000000e+00> : vector<10x10xf32>
    %46 = tpu.matmul %26, %26, %cst_15 {dimension_numbers = #tpu.dot_dimension_numbers<[1], [1], [0], [0], [0, 0, 1, 0], [], []>} : vector<10x10xf32>, vector<10x10xf32>, vector<10x10xf32> -> vector<10x10xf32>
    %cst_16 = arith.constant dense<0.000000e+00> : vector<10x10xf32>
    %47 = tpu.matmul %45, %45, %cst_16 {dimension_numbers = #tpu.dot_dimension_numbers<[1], [1], [0], [0], [0, 0, 1, 0], [], []>} : vector<10x10xf32>, vector<10x10xf32>, vector<10x10xf32> -> vector<10x10xf32>
    %48 = vector.shape_cast %46 : vector<10x10xf32> to vector<1x10x10xf32>
    %cst_17 = arith.constant dense<0.000000e+00> : vector<1xf32>
    %49 = vector.multi_reduction <add>, %48, %cst_17 [1, 2] : vector<1x10x10xf32> to vector<1xf32>
    %50 = vector.shape_cast %49 : vector<1xf32> to vector<1x1x1xf32>
    %51 = vector.extract %50[0, 0, 0] : f32 from vector<1x1x1xf32>
    %cst_18 = arith.constant 1.000000e+01 : f32
    %52 = arith.divf %51, %cst_18 : f32
    %53 = vector.broadcast %52 : f32 to vector<10x10xf32>
    %54 = arith.subf %46, %53 : vector<10x10xf32>
    %55 = vector.shape_cast %47 : vector<10x10xf32> to vector<1x10x10xf32>
    %cst_19 = arith.constant dense<0.000000e+00> : vector<1xf32>
    %56 = vector.multi_reduction <add>, %55, %cst_19 [1, 2] : vector<1x10x10xf32> to vector<1xf32>
    %57 = vector.shape_cast %56 : vector<1xf32> to vector<1x1x1xf32>
    %58 = vector.extract %57[0, 0, 0] : f32 from vector<1x1x1xf32>
    %cst_20 = arith.constant 1.000000e+01 : f32
    %59 = arith.divf %58, %cst_20 : f32
    %60 = vector.broadcast %59 : f32 to vector<10x10xf32>
    %61 = arith.subf %47, %60 : vector<10x10xf32>
    %62 = arith.mulf %54, %61 : vector<10x10xf32>
    %63 = vector.shape_cast %62 : vector<10x10xf32> to vector<1x10x10xf32>
    %cst_21 = arith.constant dense<0.000000e+00> : vector<1xf32>
    %64 = vector.multi_reduction <add>, %63, %cst_21 [1, 2] : vector<1x10x10xf32> to vector<1xf32>
    %65 = vector.shape_cast %64 : vector<1xf32> to vector<1x1x1xf32>
    %66 = vector.extract %65[0, 0, 0] : f32 from vector<1x1x1xf32>
    %67 = arith.mulf %54, %54 : vector<10x10xf32>
    %68 = vector.shape_cast %67 : vector<10x10xf32> to vector<1x10x10xf32>
    %cst_22 = arith.constant dense<0.000000e+00> : vector<1xf32>
    %69 = vector.multi_reduction <add>, %68, %cst_22 [1, 2] : vector<1x10x10xf32> to vector<1xf32>
    %70 = vector.shape_cast %69 : vector<1xf32> to vector<1x1x1xf32>
    %71 = vector.extract %70[0, 0, 0] : f32 from vector<1x1x1xf32>
    %72 = arith.mulf %61, %61 : vector<10x10xf32>
    %73 = vector.shape_cast %72 : vector<10x10xf32> to vector<1x10x10xf32>
    %cst_23 = arith.constant dense<0.000000e+00> : vector<1xf32>
    %74 = vector.multi_reduction <add>, %73, %cst_23 [1, 2] : vector<1x10x10xf32> to vector<1xf32>
    %75 = vector.shape_cast %74 : vector<1xf32> to vector<1x1x1xf32>
    %76 = vector.extract %75[0, 0, 0] : f32 from vector<1x1x1xf32>
    %77 = arith.mulf %71, %76 : f32
    %78 = math.sqrt %77 : f32
    %79 = arith.divf %66, %78 : f32
    %80 = vector.broadcast %79 : f32 to vector<1x8x128xf32>
    %c0_24 = arith.constant 0 : index
    %c0_25 = arith.constant 0 : index
    %c0_26 = arith.constant 0 : index
    %81 = vector.load %arg6[%c0_24, %c0_25, %c0_26] : memref<1x8x128xf32, #tpu.memory_space<vmem>>, vector<1x8x128xf32>
    tpu.vector_store %arg6[%c0_24, %c0_25, %c0_26], %80 {strides = array<i32>} : memref<1x8x128xf32, #tpu.memory_space<vmem>>, vector<1x8x128xf32>,
    %c0_i32 = arith.constant 0 : i32
    %82 = arith.cmpi eq, %arg0, %c0_i32 : i32
    %83 = arith.extui %82 : i1 to i32
    %c0_i32_27 = arith.constant 0 : i32
    %84 = arith.cmpi ne, %83, %c0_i32_27 : i32
    scf.if %84 {
      %c0_28 = arith.constant 0 : index
      %c0_29 = arith.constant 0 : index
      %c0_30 = arith.constant 0 : index
      %85 = vector.load %arg2[%c0_28, %c0_29, %c0_30] : memref<1x20x3072xbf16, #tpu.memory_space<vmem>>, vector<1x10x3072xbf16>
      %86 = vector.shape_cast %85 : vector<1x10x3072xbf16> to vector<10x3072xbf16>
      %c0_31 = arith.constant 0 : index
      %c0_32 = arith.constant 0 : index
      %87 = vector.load %arg4[%c0_31, %c0_32] : memref<20x3072xbf16, #tpu.memory_space<vmem>>, vector<20x3072xbf16>
      %cst_33 = arith.constant dense<0.000000e+00> : vector<20x10xf32>
      %88 = tpu.matmul %87, %86, %cst_33 {dimension_numbers = #tpu.dot_dimension_numbers<[1], [1], [0], [0], [0, 0, 1, 0], [], []>} : vector<20x3072xbf16>, vector<10x3072xbf16>, vector<20x10xf32> -> vector<20x10xf32>
      %89 = vector.extract_strided_slice %4 {offsets = [0, 0], sizes = [1, 10], strides = [1, 1]} : vector<1x20xf32> to vector<1x10xf32>
      %90 = vector.broadcast %89 : vector<1x10xf32> to vector<20x10xf32>
      %91 = arith.addf %88, %90 : vector<20x10xf32>
      %cst_34 = arith.constant dense<0xFF800000> : vector<20xf32>
      %92 = vector.multi_reduction <maximumf>, %91, %cst_34 [1] : vector<20x10xf32> to vector<20xf32>
      %93 = vector.shape_cast %92 : vector<20xf32> to vector<20x1xf32>
      %94 = tpu.iota {dimensions = array<i32: 1>} : vector<20x10xi32>
      %95 = vector.broadcast %93 : vector<20x1xf32> to vector<20x10xf32>
      %96 = arith.cmpf oge, %91, %95 : vector<20x10xf32>
      %c10_i32 = arith.constant 10 : i32
      %97 = vector.broadcast %c10_i32 : i32 to vector<20x10xi32>
      %98 = arith.select %96, %94, %97 : vector<20x10xi1>, vector<20x10xi32>
      %cst_35 = arith.constant dense<2147483647> : vector<20xi32>
      %99 = vector.multi_reduction <minsi>, %98, %cst_35 [1] : vector<20x10xi32> to vector<20xi32>
      %100 = vector.shape_cast %99 : vector<20xi32> to vector<20x1xi32>
      %c0_36 = arith.constant 0 : index
      %c0_37 = arith.constant 0 : index
      %101 = vector.load %arg5[%c0_36, %c0_37] : memref<20x1xi32, #tpu.memory_space<vmem>>, vector<20x1xi32>
      %102 = arith.cmpi eq, %100, %101 : vector<20x1xi32>
      %103 = arith.extui %102 : vector<20x1xi1> to vector<20x1xi32>
      %104 = vector.shape_cast %103 : vector<20x1xi32> to vector<1x20x1xi32>
      %cst_38 = arith.constant dense<0> : vector<1xi32>
      %105 = vector.multi_reduction <add>, %104, %cst_38 [1, 2] : vector<1x20x1xi32> to vector<1xi32>
      %106 = vector.shape_cast %105 : vector<1xi32> to vector<1x1x1xi32>
      %107 = vector.extract %106[0, 0, 0] : i32 from vector<1x1x1xi32>
      %108 = vector.broadcast %107 : i32 to vector<1x8x128xi32>
      %c0_39 = arith.constant 0 : index
      %c0_40 = arith.constant 0 : index
      %c0_41 = arith.constant 0 : index
      %109 = vector.load %arg7[%c0_39, %c0_40, %c0_41] : memref<1x8x128xi32, #tpu.memory_space<vmem>>, vector<1x8x128xi32>
      tpu.vector_store %arg7[%c0_39, %c0_40, %c0_41], %108 {strides = array<i32>} : memref<1x8x128xi32, #tpu.memory_space<vmem>>, vector<1x8x128xi32>,
    } else {
    }
    return
  }
  func.func @transform_0(%arg0: i32) -> (i32, i32) {
    %c0_i32 = arith.constant 0 : i32
    %c0_i32_0 = arith.constant 0 : i32
    %c0_i32_1 = arith.constant 0 : i32
    return %c0_i32, %c0_i32_0 : i32, i32
  }
  func.func @transform_1(%arg0: i32) -> (i32, i32, i32) {
    %c0_i32 = arith.constant 0 : i32
    %c0_i32_0 = arith.constant 0 : i32
    %c0_i32_1 = arith.constant 0 : i32
    return %arg0, %c0_i32, %c0_i32_0 : i32, i32, i32
  }
  func.func @transform_2(%arg0: i32) -> (i32, i32, i32) {
    %c0_i32 = arith.constant 0 : i32
    %c0_i32_0 = arith.constant 0 : i32
    %c0_i32_1 = arith.constant 0 : i32
    return %arg0, %c0_i32, %c0_i32_0 : i32, i32, i32
  }
  func.func @transform_3(%arg0: i32) -> (i32, i32) {
    %c0_i32 = arith.constant 0 : i32
    %c0_i32_0 = arith.constant 0 : i32
    %c0_i32_1 = arith.constant 0 : i32
    return %c0_i32, %c0_i32_0 : i32, i32
  }
  func.func @transform_4(%arg0: i32) -> (i32, i32) {
    %c0_i32 = arith.constant 0 : i32
    %c0_i32_0 = arith.constant 0 : i32
    %c0_i32_1 = arith.constant 0 : i32
    return %c0_i32, %c0_i32_0 : i32, i32
  }
  func.func @transform_5(%arg0: i32) -> (i32, i32, i32) {
    %c0_i32 = arith.constant 0 : i32
    %c0_i32_0 = arith.constant 0 : i32
    %c0_i32_1 = arith.constant 0 : i32
    return %arg0, %c0_i32, %c0_i32_0 : i32, i32, i32
  }
  func.func @transform_6(%arg0: i32) -> (i32, i32, i32) {
    %c0_i32 = arith.constant 0 : i32
    %c0_i32_0 = arith.constant 0 : i32
    %c0_i32_1 = arith.constant 0 : i32
    return %arg0, %c0_i32, %c0_i32_0 : i32, i32, i32
  }
}

</mosaic_0001>

<llo_original>
// kernel: tpu_custom_call.1
$region0: #{tpu_custom_call.1}
  #allocation0 [shape = 'u32[]', space=smem, size = 0x4, offset = 0x4, fixed_abs, tag = 'smem constant byte address 0x4 - core index']
  #allocation1 [shape = 'u32[144,128]{1,0:T(1,128)}', space=vmem, size = 0x12000, scoped, tag = 'internal scratch']
  %s0 = inlined_call_operand.hbm [shape: bf16[10,3072], index: 0, kind: input, shape index: {}]
  %s1 = inlined_call_operand.hbm [shape: bf16[10,20,3072], index: 1, kind: input, shape index: {}]
  %s2 = inlined_call_operand.hbm [shape: f32[10,1,20], index: 2, kind: input, shape index: {}]
  %s3 = inlined_call_operand.hbm [shape: bf16[20,3072], index: 3, kind: input, shape index: {}]
  %s4 = inlined_call_operand.vmem [shape: s32[20,1], index: 4, kind: input, shape index: {}]
  %s5 = inlined_call_operand.hbm [shape: f32[10,8,128], index: 5, kind: output, shape index: {0}]
  %s6 = inlined_call_operand.hbm [shape: s32[10,8,128], index: 6, kind: output, shape index: {1}]
  %7 = xla_tuple %s5, %s6
  %s8 = sld [smem:[#allocation0]]
  $region81: #{tpu_custom_call.1} parent=0
    _
  %s10 = ssub.s32 1, %s8
  %s11 = scalar_select 0, %s10, %s8
  $region1: #{tpu_custom_call.1} parent=0
    #allocation2 [shape = 'u8[98304]{0}', space=vmem, size = 0x18000, scoped, tag = 'input window, operand 0, single buffered']
    #allocation3 [shape = 's32[2]{0}', space=sflag, size = 0x8, scoped, tag = 'scoped memory for tpu_custom_call.1']
    #allocation4 [shape = 's32[2]{0}', space=sflag, size = 0x8, scoped, tag = 'scoped memory for tpu_custom_call.1']
    #allocation5 [shape = 'u8[294912]{0}', space=vmem, size = 0x48000, scoped, tag = 'input window, operand 1']
    #allocation6 [shape = 's32[2]{0}', space=sflag, size = 0x8, scoped, tag = 'scoped memory for tpu_custom_call.1']
    #allocation7 [shape = 'u8[1024]{0}', space=vmem, size = 0x400, scoped, tag = 'input window, operand 2']
    #allocation8 [shape = 'u8[147456]{0}', space=vmem, size = 0x24000, scoped, tag = 'input window, operand 3, single buffered']
    #allocation9 [shape = 's32[1]{0}', space=sflag, size = 0x4, scoped, tag = 'scoped memory for tpu_custom_call.1']
    #allocation10 [shape = 'u8[8192]{0}', space=vmem, size = 0x2000, scoped, tag = 'output window, operand 0']
    #allocation11 [shape = 'u8[8192]{0}', space=vmem, size = 0x2000, scoped, tag = 'output window, operand 1']
    #allocation12 [shape = 's32[2]{0}', space=sflag, size = 0x8, scoped, tag = 'scoped memory for tpu_custom_call.1']
    %12 = vsyncpa [#allocation3], 0
    %13 = vsyncpa [#allocation6], 0
    %s14 = scalar_lea.sflag [#allocation6], 1
    %15 = vsyncpa %s14, 0
    %16 = vsyncpa [#allocation9], 0
    %17 = vsyncpa [#allocation4], 0
    %s18 = scalar_lea.sflag [#allocation4], 1
    %19 = vsyncpa %s18, 0
    %20 = vsyncpa [#allocation12], 0
    %s21 = scalar_lea.sflag [#allocation12], 1
    %22 = vsyncpa %s21, 0
    loop: start=0, step=1, limit=12
    $region2: #{tpu_custom_call.1} parent=1 // loop_pre_header
      _
    $region3: #{tpu_custom_call.1} parent=1 // loop_header
      %s24 = sphi 0, %s28
      %p25 = scmp.ge.s32.totalorder %s24, 12
      %s32 = sphi 0, %s32
      %s34 = sphi 0, %s32
      %s35 = sphi 0, %s34
      %s49 = sphi 0, %s35
      %s55 = sphi 0, %s57
      %s58 = sphi 0, %s55
      %s59 = sphi 0, %s58
      %s75 = sphi 0, %s59
      %s81 = sphi 0, %s83
      %s84 = sphi 0, %s81
      %s85 = sphi 0, %s84
      %s101 = sphi 0, %s85
      %s105 = sphi 0, %s105
      %s107 = sphi 0, %s105
      %s108 = sphi 0, %s107
      %s122 = sphi 0, %s108
      %s126 = sphi 0, %s126
      %s128 = sphi 0, %s126
      %s129 = sphi 0, %s128
      %s143 = sphi 0, %s129
      %s149 = sphi 0, %s151
      %s152 = sphi 0, %s149
      %s153 = sphi 0, %s152
      %s169 = sphi 0, %s153
      %s175 = sphi 0, %s177
      %s178 = sphi 0, %s175
      %s179 = sphi 0, %s178
      %s195 = sphi 0, %s179
    $region4: #{tpu_custom_call.1} parent=1 // loop_header_branch
      %27 = sbr.rel (%p25) target = $region8
    $region5: #{tpu_custom_call.1} parent=1 // loop_body
      %s29 = ssub.s32 %s24, 1
      %s30 = ssub.s32 %s24, 2
      %s31 = sadd.s32 %s24, 1
      %s33 = sadd.s32 %s32, 1
      %p36 = scmp.eq.s32.totalorder %s24, 9
      %p37 = scmp.ne.s32.totalorder %s32, %s34
      %p38 = scmp.eq.s32.totalorder %s24, 0
      %p39 = por %p37, %p38
      %p40 = scmp.ne.s32.totalorder %s32, %s34
      %p41 = scmp.eq.s32.totalorder %s29, 9
      %p42 = por %p40, %p41
      %p43 = scmp.ne.s32.totalorder %s34, %s35
      %p44 = scmp.eq.s32.totalorder %s29, 0
      %p45 = por %p43, %p44
      %p46 = scmp.ne.s32.totalorder %s34, %s35
      %p47 = scmp.eq.s32.totalorder %s30, 9
      %p48 = por %p46, %p47
      %p50 = scmp.ne.s32.totalorder %s35, %s49
      %p51 = scmp.eq.s32.totalorder %s30, 0
      %p52 = por %p50, %p51
      %s53 = ssub.s32 %s24, %s31
      %p54 = scmp.eq.s32.totalorder %s53, 0
      %s56 = sadd.s32 %s55, 1
      %s57 = scalar_select %p54, %s55, %s56
      %p60 = pneg %p54
      %p61 = scmp.eq.s32.totalorder %s24, 9
      %p62 = por %p60, %p61
      %p63 = scmp.ne.s32.totalorder %s55, %s58
      %p64 = scmp.eq.s32.totalorder %s24, 0
      %p65 = por %p63, %p64
      %p66 = scmp.ne.s32.totalorder %s55, %s58
      %p67 = scmp.eq.s32.totalorder %s29, 9
      %p68 = por %p66, %p67
      %p69 = scmp.ne.s32.totalorder %s58, %s59
      %p70 = scmp.eq.s32.totalorder %s29, 0
      %p71 = por %p69, %p70
      %p72 = scmp.ne.s32.totalorder %s58, %s59
      %p73 = scmp.eq.s32.totalorder %s30, 9
      %p74 = por %p72, %p73
      %p76 = scmp.ne.s32.totalorder %s59, %s75
      %p77 = scmp.eq.s32.totalorder %s30, 0
      %p78 = por %p76, %p77
      %s79 = ssub.s32 %s24, %s31
      %p80 = scmp.eq.s32.totalorder %s79, 0
      %s82 = sadd.s32 %s81, 1
      %s83 = scalar_select %p80, %s81, %s82
      %p86 = pneg %p80
      %p87 = scmp.eq.s32.totalorder %s24, 9
      %p88 = por %p86, %p87
      %p89 = scmp.ne.s32.totalorder %s81, %s84
      %p90 = scmp.eq.s32.totalorder %s24, 0
      %p91 = por %p89, %p90
      %p92 = scmp.ne.s32.totalorder %s81, %s84
      %p93 = scmp.eq.s32.totalorder %s29, 9
      %p94 = por %p92, %p93
      %p95 = scmp.ne.s32.totalorder %s84, %s85
      %p96 = scmp.eq.s32.totalorder %s29, 0
      %p97 = por %p95, %p96
      %p98 = scmp.ne.s32.totalorder %s84, %s85
      %p99 = scmp.eq.s32.totalorder %s30, 9
      %p100 = por %p98, %p99
      %p102 = scmp.ne.s32.totalorder %s85, %s101
      %p103 = scmp.eq.s32.totalorder %s30, 0
      %p104 = por %p102, %p103
      %s106 = sadd.s32 %s105, 1
      %p109 = scmp.eq.s32.totalorder %s24, 9
      %p110 = scmp.ne.s32.totalorder %s105, %s107
      %p111 = scmp.eq.s32.totalorder %s24, 0
      %p112 = por %p110, %p111
      %p113 = scmp.ne.s32.totalorder %s105, %s107
      %p114 = scmp.eq.s32.totalorder %s29, 9
      %p115 = por %p113, %p114
      %p116 = scmp.ne.s32.totalorder %s107, %s108
      %p117 = scmp.eq.s32.totalorder %s29, 0
      %p118 = por %p116, %p117
      %p119 = scmp.ne.s32.totalorder %s107, %s108
      %p120 = scmp.eq.s32.totalorder %s30, 9
      %p121 = por %p119, %p120
      %p123 = scmp.ne.s32.totalorder %s108, %s122
      %p124 = scmp.eq.s32.totalorder %s30, 0
      %p125 = por %p123, %p124
      %s127 = sadd.s32 %s126, 1
      %p130 = scmp.eq.s32.totalorder %s24, 9
      %p131 = scmp.ne.s32.totalorder %s126, %s128
      %p132 = scmp.eq.s32.totalorder %s24, 0
      %p133 = por %p131, %p132
      %p134 = scmp.ne.s32.totalorder %s126, %s128
      %p135 = scmp.eq.s32.totalorder %s29, 9
      %p136 = por %p134, %p135
      %p137 = scmp.ne.s32.totalorder %s128, %s129
      %p138 = scmp.eq.s32.totalorder %s29, 0
      %p139 = por %p137, %p138
      %p140 = scmp.ne.s32.totalorder %s128, %s129
      %p141 = scmp.eq.s32.totalorder %s30, 9
      %p142 = por %p140, %p141
      %p144 = scmp.ne.s32.totalorder %s129, %s143
      %p145 = scmp.eq.s32.totalorder %s30, 0
      %p146 = por %p144, %p145
      %s147 = ssub.s32 %s24, %s31
      %p148 = scmp.eq.s32.totalorder %s147, 0
      %s150 = sadd.s32 %s149, 1
      %s151 = scalar_select %p148, %s149, %s150
      %p154 = pneg %p148
      %p155 = scmp.eq.s32.totalorder %s24, 9
      %p156 = por %p154, %p155
      %p157 = scmp.ne.s32.totalorder %s149, %s152
      %p158 = scmp.eq.s32.totalorder %s24, 0
      %p159 = por %p157, %p158
      %p160 = scmp.ne.s32.totalorder %s149, %s152
      %p161 = scmp.eq.s32.totalorder %s29, 9
      %p162 = por %p160, %p161
      %p163 = scmp.ne.s32.totalorder %s152, %s153
      %p164 = scmp.eq.s32.totalorder %s29, 0
      %p165 = por %p163, %p164
      %p166 = scmp.ne.s32.totalorder %s152, %s153
      %p167 = scmp.eq.s32.totalorder %s30, 9
      %p168 = por %p166, %p167
      %p170 = scmp.ne.s32.totalorder %s153, %s169
      %p171 = scmp.eq.s32.totalorder %s30, 0
      %p172 = por %p170, %p171
      %s173 = ssub.s32 %s24, %s31
      %p174 = scmp.eq.s32.totalorder %s173, 0
      %s176 = sadd.s32 %s175, 1
      %s177 = scalar_select %p174, %s175, %s176
      %p180 = pneg %p174
      %p181 = scmp.eq.s32.totalorder %s24, 9
      %p182 = por %p180, %p181
      %p183 = scmp.ne.s32.totalorder %s175, %s178
      %p184 = scmp.eq.s32.totalorder %s24, 0
      %p185 = por %p183, %p184
      %p186 = scmp.ne.s32.totalorder %s175, %s178
      %p187 = scmp.eq.s32.totalorder %s29, 9
      %p188 = por %p186, %p187
      %p189 = scmp.ne.s32.totalorder %s178, %s179
      %p190 = scmp.eq.s32.totalorder %s29, 0
      %p191 = por %p189, %p190
      %p192 = scmp.ne.s32.totalorder %s178, %s179
      %p193 = scmp.eq.s32.totalorder %s30, 9
      %p194 = por %p192, %p193
      %p196 = scmp.ne.s32.totalorder %s179, %s195
      %p197 = scmp.eq.s32.totalorder %s30, 0
      %p198 = por %p196, %p197
      %p199 = scmp.le.s32.totalorder 1, %s24
      %p200 = scmp.lt.s32.totalorder %s24, 11
      %p201 = pnand %p199, %p200
      %p202 = pneg %p201
      // Predicated region
      $region9: #{tpu_custom_call.1} parent=5 // pred_check
        _
      $region10: #{tpu_custom_call.1} parent=5 // pred_check_branch
        %204 = sbr.rel (%p201) target = $region12
      $region11: #{tpu_custom_call.1} parent=5 // pred_region
        %s205 = ssub.s32 %s24, 1
        // Predicated region
        $region13: #{tpu_custom_call.1} parent=11 // pred_check
          %p206 = pneg %p45
        $region14: #{tpu_custom_call.1} parent=11 // pred_check_branch
          %208 = sbr.rel (%p206) target = $region16
        $region15: #{tpu_custom_call.1} parent=11 // pred_region
          %s210 = ssub.s32 3072, 3072
          %211 = vsyncadd [#allocation3], %s210
          %s212 = sshll.u32 [#allocation2], 4
          %s213 = int_to_ptr.vmem [resolvable:$true] %s212
          %218 = dma.hbm_to_vmem [thread:$0]  %s0, 3072, %s213, [#allocation3], 1536, 1536, 96
        $region16: #{tpu_custom_call.1} parent=11 // pred_fallthru
          _
        // Predicated region
        $region17: #{tpu_custom_call.1} parent=11 // pred_check
          %p219 = pneg %p118
        $region18: #{tpu_custom_call.1} parent=11 // pred_check_branch
          %221 = sbr.rel (%p219) target = $region20
        $region19: #{tpu_custom_call.1} parent=11 // pred_region
          %s223 = ssub.s32 4608, 4608
          %224 = vsyncadd [#allocation9], %s223
          %s225 = sshll.u32 [#allocation8], 4
          %s226 = int_to_ptr.vmem [resolvable:$true] %s225
          %231 = dma.hbm_to_vmem [thread:$0]  %s3, 4608, %s226, [#allocation9], 1536, 1536, 96
        $region20: #{tpu_custom_call.1} parent=11 // pred_fallthru
          _
        // Predicated region
        $region21: #{tpu_custom_call.1} parent=11 // pred_check
          %p232 = pneg %p139
        $region22: #{tpu_custom_call.1} parent=11 // pred_check_branch
          %234 = sbr.rel (%p232) target = $region24
        $region23: #{tpu_custom_call.1} parent=11 // pred_region
          _
        $region24: #{tpu_custom_call.1} parent=11 // pred_fallthru
          _
      $region12: #{tpu_custom_call.1} parent=5 // pred_fallthru
        _
      %p235 = scmp.lt.s32.totalorder %s24, 10
      // Predicated region
      $region25: #{tpu_custom_call.1} parent=5 // pred_check
        %p236 = pneg %p235
      $region26: #{tpu_custom_call.1} parent=5 // pred_check_branch
        %238 = sbr.rel (%p236) target = $region28
      $region27: #{tpu_custom_call.1} parent=5 // pred_region
        // Predicated region
        $region29: #{tpu_custom_call.1} parent=27 // pred_check
          %p239 = pneg %p65
        $region30: #{tpu_custom_call.1} parent=27 // pred_check_branch
          %241 = sbr.rel (%p239) target = $region32
        $region31: #{tpu_custom_call.1} parent=27 // pred_region
          %s242 = sand.u32 %s24, 1
          %s243 = scalar_lea.sflag [#allocation6], %s242
          %s244 = sand.u32 %s55, 1
          %s245 = smul.addr %s244, 288
          %s246 = scalar_lea.vmem [#allocation5], %s245
          %s248 = ssub.s32 4608, 4608
          %249 = vsyncadd %s243, %s248
          %s250 = smul.addr %s24, 72
          %s251 = smul.addr %s250, 64
          %s252 = scalar_lea.hbm %s1, %s251
          %s253 = sshll.u32 %s246, 4
          %s254 = int_to_ptr.vmem [resolvable:$true] %s253
          %259 = dma.hbm_to_vmem [thread:$0]  %s252, 4608, %s254, %s243, 1536, 1536, 96
        $region32: #{tpu_custom_call.1} parent=27 // pred_fallthru
          _
        // Predicated region
        $region33: #{tpu_custom_call.1} parent=27 // pred_check
          %p260 = pneg %p91
        $region34: #{tpu_custom_call.1} parent=27 // pred_check_branch
          %262 = sbr.rel (%p260) target = $region36
        $region35: #{tpu_custom_call.1} parent=27 // pred_region
          %s263 = sand.u32 %s24, 1
          %s264 = scalar_lea.sflag [#allocation6], %s263
          %s265 = sand.u32 %s81, 1
          %s266 = scalar_lea.vmem [#allocation7], %s265
          %s268 = ssub.s32 16, 16
          %269 = vsyncadd %s264, %s268
          %s270 = smul.addr %s24, 16
          %s271 = scalar_lea.hbm %s2, %s270
          %s273 = sshll.u32 %s266, 4
          %s274 = int_to_ptr.vmem [resolvable:$true] %s273
          %276 = dma.hbm_to_vmem [thread:$0]  %s271, 16, %s274, %s264
        $region36: #{tpu_custom_call.1} parent=27 // pred_fallthru
          _
      $region28: #{tpu_custom_call.1} parent=5 // pred_fallthru
        _
      %p277 = scmp.le.s32.totalorder 1, %s24
      %p278 = scmp.lt.s32.totalorder %s24, 11
      %p279 = pnand %p277, %p278
      %p280 = pneg %p279
      // Predicated region
      $region37: #{tpu_custom_call.1} parent=5 // pred_check
        _
      $region38: #{tpu_custom_call.1} parent=5 // pred_check_branch
        %282 = sbr.rel (%p279) target = $region40
      $region39: #{tpu_custom_call.1} parent=5 // pred_region
        %s283 = ssub.s32 %s24, 1
        // Predicated region
        $region41: #{tpu_custom_call.1} parent=39 // pred_check
          %p284 = pneg %p45
        $region42: #{tpu_custom_call.1} parent=39 // pred_check_branch
          %286 = sbr.rel (%p284) target = $region44
        $region43: #{tpu_custom_call.1} parent=39 // pred_region
          %287 = dma.done [#allocation3], 3072
        $region44: #{tpu_custom_call.1} parent=39 // pred_fallthru
          _
        %s288 = sand.u32 %s29, 1
        %s289 = scalar_lea.sflag [#allocation6], %s288
        %s290 = sand.u32 %s58, 1
        %s291 = smul.addr %s290, 288
        %s292 = scalar_lea.vmem [#allocation5], %s291
        // Predicated region
        $region45: #{tpu_custom_call.1} parent=39 // pred_check
          %p293 = pneg %p71
        $region46: #{tpu_custom_call.1} parent=39 // pred_check_branch
          %295 = sbr.rel (%p293) target = $region48
        $region47: #{tpu_custom_call.1} parent=39 // pred_region
          %296 = dma.done %s289, 4608
        $region48: #{tpu_custom_call.1} parent=39 // pred_fallthru
          _
        %s297 = sand.u32 %s29, 1
        %s298 = scalar_lea.sflag [#allocation6], %s297
        %s299 = sand.u32 %s84, 1
        %s300 = scalar_lea.vmem [#allocation7], %s299
        // Predicated region
        $region49: #{tpu_custom_call.1} parent=39 // pred_check
          %p301 = pneg %p97
        $region50: #{tpu_custom_call.1} parent=39 // pred_check_branch
          %303 = sbr.rel (%p301) target = $region52
        $region51: #{tpu_custom_call.1} parent=39 // pred_region
          %304 = dma.done %s298, 16
        $region52: #{tpu_custom_call.1} parent=39 // pred_fallthru
          _
        // Predicated region
        $region53: #{tpu_custom_call.1} parent=39 // pred_check
          %p305 = pneg %p118
        $region54: #{tpu_custom_call.1} parent=39 // pred_check_branch
          %307 = sbr.rel (%p305) target = $region56
        $region55: #{tpu_custom_call.1} parent=39 // pred_region
          %308 = dma.done [#allocation9], 4608
        $region56: #{tpu_custom_call.1} parent=39 // pred_fallthru
          _
        %p309 = pneg %p45
        %p310 = pneg %p42
        %s311 = sand.u32 %s29, 1
        %s312 = scalar_lea.sflag [#allocation6], %s311
        %s313 = sand.u32 %s58, 1
        %s314 = smul.addr %s313, 288
        %s315 = scalar_lea.vmem [#allocation5], %s314
        %p316 = pneg %p71
        %p317 = pneg %p68
        %s318 = sand.u32 %s29, 1
        %s319 = scalar_lea.sflag [#allocation6], %s318
        %s320 = sand.u32 %s84, 1
        %s321 = scalar_lea.vmem [#allocation7], %s320
        %p322 = pneg %p97
        %p323 = pneg %p94
        %p324 = pneg %p118
        %p325 = pneg %p115
        %p326 = pneg %p139
        %p327 = pneg %p136
        %p328 = pneg %p165
        %p329 = pneg %p162
        %s330 = sand.u32 %s152, 1
        %s331 = scalar_lea.sflag [#allocation4], %s330
        %s332 = sand.u32 %s152, 1
        %s333 = smul.addr %s332, 8
        %s334 = scalar_lea.vmem [#allocation10], %s333
        %p335 = pneg %p191
        %p336 = pneg %p188
        %s337 = sand.u32 %s178, 1
        %s338 = scalar_lea.sflag [#allocation12], %s337
        %s339 = sand.u32 %s178, 1
        %s340 = smul.addr %s339, 8
        %s341 = scalar_lea.vmem [#allocation11], %s340
        %v343 = vld [vmem:[#allocation2] sm:$0xff]
        %v344 = vld [vmem:[#allocation2 + $0x8] sm:$0xff]
        %v345 = vld [vmem:[#allocation2 + $0x10] sm:$0xff]
        %v346 = vld [vmem:[#allocation2 + $0x18] sm:$0xff]
        %v347 = vld [vmem:[#allocation2 + $0x20] sm:$0xff]
        %v348 = vld [vmem:[#allocation2 + $0x28] sm:$0xff]
        %v349 = vld [vmem:[#allocation2 + $0x30] sm:$0xff]
        %v350 = vld [vmem:[#allocation2 + $0x38] sm:$0xff]
        %v351 = vld [vmem:[#allocation2 + $0x40] sm:$0xff]
        %v352 = vld [vmem:[#allocation2 + $0x48] sm:$0xff]
        %v353 = vld [vmem:[#allocation2 + $0x50] sm:$0xff]
        %v354 = vld [vmem:[#allocation2 + $0x58] sm:$0xff]
        %v355 = vld [vmem:[#allocation2 + $0x60] sm:$0x11]
        %v356 = vld [vmem:[#allocation2 + $0x68] sm:$0x11]
        %v357 = vld [vmem:[#allocation2 + $0x70] sm:$0x11]
        %v358 = vld [vmem:[#allocation2 + $0x78] sm:$0x11]
        %v359 = vld [vmem:[#allocation2 + $0x80] sm:$0x11]
        %v360 = vld [vmem:[#allocation2 + $0x88] sm:$0x11]
        %v361 = vld [vmem:[#allocation2 + $0x90] sm:$0x11]
        %v362 = vld [vmem:[#allocation2 + $0x98] sm:$0x11]
        %v363 = vld [vmem:[#allocation2 + $0xa0] sm:$0x11]
        %v364 = vld [vmem:[#allocation2 + $0xa8] sm:$0x11]
        %v365 = vld [vmem:[#allocation2 + $0xb0] sm:$0x11]
        %v366 = vld [vmem:[#allocation2 + $0xb8] sm:$0x11]
        %v367 = vld [vmem:[%s292] sm:$0xff]
        %v368 = vld [vmem:[%s292 + $0x8] sm:$0xff]
        %v369 = vld [vmem:[%s292 + $0x10] sm:$0xff]
        %v370 = vld [vmem:[%s292 + $0x18] sm:$0xff]
        %v371 = vld [vmem:[%s292 + $0x20] sm:$0xff]
        %v372 = vld [vmem:[%s292 + $0x28] sm:$0xff]
        %v373 = vld [vmem:[%s292 + $0x30] sm:$0xff]
        %v374 = vld [vmem:[%s292 + $0x38] sm:$0xff]
        %v375 = vld [vmem:[%s292 + $0x40] sm:$0xff]
        %v376 = vld [vmem:[%s292 + $0x48] sm:$0xff]
        %v377 = vld [vmem:[%s292 + $0x50] sm:$0xff]
        %v378 = vld [vmem:[%s292 + $0x58] sm:$0xff]
        %v379 = vld [vmem:[%s292 + $0x60] sm:$0xff]
        %v380 = vld [vmem:[%s292 + $0x68] sm:$0xff]
        %v381 = vld [vmem:[%s292 + $0x70] sm:$0xff]
        %v382 = vld [vmem:[%s292 + $0x78] sm:$0xff]
        %v383 = vld [vmem:[%s292 + $0x80] sm:$0xff]
        %v384 = vld [vmem:[%s292 + $0x88] sm:$0xff]
        %v385 = vld [vmem:[%s292 + $0x90] sm:$0xff]
        %v386 = vld [vmem:[%s292 + $0x98] sm:$0xff]
        %v387 = vld [vmem:[%s292 + $0xa0] sm:$0xff]
        %v388 = vld [vmem:[%s292 + $0xa8] sm:$0xff]
        %v389 = vld [vmem:[%s292 + $0xb0] sm:$0xff]
        %v390 = vld [vmem:[%s292 + $0xb8] sm:$0xff]
        %v391 = vld [vmem:[%s292 + $0xc0] sm:$0x33]
        %v392 = vld [vmem:[%s292 + $0xc8] sm:$0x33]
        %v393 = vld [vmem:[%s292 + $0xd0] sm:$0x33]
        %v394 = vld [vmem:[%s292 + $0xd8] sm:$0x33]
        %v395 = vld [vmem:[%s292 + $0xe0] sm:$0x33]
        %v396 = vld [vmem:[%s292 + $0xe8] sm:$0x33]
        %v397 = vld [vmem:[%s292 + $0xf0] sm:$0x33]
        %v398 = vld [vmem:[%s292 + $0xf8] sm:$0x33]
        %v399 = vld [vmem:[%s292 + $0x100] sm:$0x33]
        %v400 = vld [vmem:[%s292 + $0x108] sm:$0x33]
        %v401 = vld [vmem:[%s292 + $0x110] sm:$0x33]
        %v402 = vld [vmem:[%s292 + $0x118] sm:$0x33]
        %v403 = vld [vmem:[%s300] sm:$0x1]
        %v405 = vlaneseq
        %v406 = vshrl.u32 %v405, 7
        %v407 = vsub.s32 0, %v406
        %v408 = vrot.slane %v403, %v407
        %v434 = vunpack.c.l.b16 %v343
        %v435 = vunpack.c.h.b16 %v343
        %v436 = vunpack.c.l.b16 %v344
        %v437 = vunpack.c.h.b16 %v344
        %v438 = vunpack.c.l.b16 %v345
        %v439 = vunpack.c.h.b16 %v345
        %v440 = vunpack.c.l.b16 %v346
        %v441 = vunpack.c.h.b16 %v346
        %v442 = vunpack.c.l.b16 %v347
        %v443 = vunpack.c.h.b16 %v347
        %v444 = vunpack.c.l.b16 %v348
        %v445 = vunpack.c.h.b16 %v348
        %v446 = vunpack.c.l.b16 %v349
        %v447 = vunpack.c.h.b16 %v349
        %v448 = vunpack.c.l.b16 %v350
        %v449 = vunpack.c.h.b16 %v350
        %v450 = vunpack.c.l.b16 %v351
        %v451 = vunpack.c.h.b16 %v351
        %v452 = vunpack.c.l.b16 %v352
        %v453 = vunpack.c.h.b16 %v352
        %v454 = vunpack.c.l.b16 %v353
        %v455 = vunpack.c.h.b16 %v353
        %v456 = vunpack.c.l.b16 %v354
        %v457 = vunpack.c.h.b16 %v354
        %v458 = vunpack.c.l.b16 %v355
        %v459 = vunpack.c.h.b16 %v355
        %v460 = vunpack.c.l.b16 %v356
        %v461 = vunpack.c.h.b16 %v356
        %v462 = vunpack.c.l.b16 %v357
        %v463 = vunpack.c.h.b16 %v357
        %v464 = vunpack.c.l.b16 %v358
        %v465 = vunpack.c.h.b16 %v358
        %v466 = vunpack.c.l.b16 %v359
        %v467 = vunpack.c.h.b16 %v359
        %v468 = vunpack.c.l.b16 %v360
        %v469 = vunpack.c.h.b16 %v360
        %v470 = vunpack.c.l.b16 %v361
        %v471 = vunpack.c.h.b16 %v361
        %v472 = vunpack.c.l.b16 %v362
        %v473 = vunpack.c.h.b16 %v362
        %v474 = vunpack.c.l.b16 %v363
        %v475 = vunpack.c.h.b16 %v363
        %v476 = vunpack.c.l.b16 %v364
        %v477 = vunpack.c.h.b16 %v364
        %v478 = vunpack.c.l.b16 %v365
        %v479 = vunpack.c.h.b16 %v365
        %v480 = vunpack.c.l.b16 %v366
        %v481 = vunpack.c.h.b16 %v366
        %v482 = vpack.c.b16 %v458, %v434
        %v483 = vpack.c.b16 %v459, %v435
        %v484 = vpack.c.b16 %v460, %v436
        %v485 = vpack.c.b16 %v461, %v437
        %v486 = vpack.c.b16 %v462, %v438
        %v487 = vpack.c.b16 %v463, %v439
        %v488 = vpack.c.b16 %v464, %v440
        %v489 = vpack.c.b16 %v465, %v441
        %v490 = vpack.c.b16 %v466, %v442
        %v491 = vpack.c.b16 %v467, %v443
        %v492 = vpack.c.b16 %v468, %v444
        %v493 = vpack.c.b16 %v469, %v445
        %v494 = vpack.c.b16 %v470, %v446
        %v495 = vpack.c.b16 %v471, %v447
        %v496 = vpack.c.b16 %v472, %v448
        %v497 = vpack.c.b16 %v473, %v449
        %v498 = vpack.c.b16 %v474, %v450
        %v499 = vpack.c.b16 %v475, %v451
        %v500 = vpack.c.b16 %v476, %v452
        %v501 = vpack.c.b16 %v477, %v453
        %v502 = vpack.c.b16 %v478, %v454
        %v503 = vpack.c.b16 %v479, %v455
        %v504 = vpack.c.b16 %v480, %v456
        %v505 = vpack.c.b16 %v481, %v457
        %v566 = vunpack.c.l.b16 %v367
        %v567 = vunpack.c.h.b16 %v367
        %v568 = vunpack.c.l.b16 %v368
        %v569 = vunpack.c.h.b16 %v368
        %v570 = vunpack.c.l.b16 %v369
        %v571 = vunpack.c.h.b16 %v369
        %v572 = vunpack.c.l.b16 %v370
        %v573 = vunpack.c.h.b16 %v370
        %v574 = vunpack.c.l.b16 %v371
        %v575 = vunpack.c.h.b16 %v371
        %v576 = vunpack.c.l.b16 %v372
        %v577 = vunpack.c.h.b16 %v372
        %v578 = vunpack.c.l.b16 %v373
        %v579 = vunpack.c.h.b16 %v373
        %v580 = vunpack.c.l.b16 %v374
        %v581 = vunpack.c.h.b16 %v374
        %v582 = vunpack.c.l.b16 %v375
        %v583 = vunpack.c.h.b16 %v375
        %v584 = vunpack.c.l.b16 %v376
        %v585 = vunpack.c.h.b16 %v376
        %v586 = vunpack.c.l.b16 %v377
        %v587 = vunpack.c.h.b16 %v377
        %v588 = vunpack.c.l.b16 %v378
        %v589 = vunpack.c.h.b16 %v378
        %v590 = vunpack.c.l.b16 %v379
        %v591 = vunpack.c.h.b16 %v379
        %v592 = vunpack.c.l.b16 %v380
        %v593 = vunpack.c.h.b16 %v380
        %v594 = vunpack.c.l.b16 %v381
        %v595 = vunpack.c.h.b16 %v381
        %v596 = vunpack.c.l.b16 %v382
        %v597 = vunpack.c.h.b16 %v382
        %v598 = vunpack.c.l.b16 %v383
        %v599 = vunpack.c.h.b16 %v383
        %v600 = vunpack.c.l.b16 %v384
        %v601 = vunpack.c.h.b16 %v384
        %v602 = vunpack.c.l.b16 %v385
        %v603 = vunpack.c.h.b16 %v385
        %v604 = vunpack.c.l.b16 %v386
        %v605 = vunpack.c.h.b16 %v386
        %v606 = vunpack.c.l.b16 %v387
        %v607 = vunpack.c.h.b16 %v387
        %v608 = vunpack.c.l.b16 %v388
        %v609 = vunpack.c.h.b16 %v388
        %v610 = vunpack.c.l.b16 %v389
        %v611 = vunpack.c.h.b16 %v389
        %v612 = vunpack.c.l.b16 %v390
        %v613 = vunpack.c.h.b16 %v390
        %v614 = vunpack.c.l.b16 %v391
        %v615 = vunpack.c.h.b16 %v391
        %v616 = vunpack.c.l.b16 %v392
        %v617 = vunpack.c.h.b16 %v392
        %v618 = vunpack.c.l.b16 %v393
        %v619 = vunpack.c.h.b16 %v393
        %v620 = vunpack.c.l.b16 %v394
        %v621 = vunpack.c.h.b16 %v394
        %v622 = vunpack.c.l.b16 %v395
        %v623 = vunpack.c.h.b16 %v395
        %v624 = vunpack.c.l.b16 %v396
        %v625 = vunpack.c.h.b16 %v396
        %v626 = vunpack.c.l.b16 %v397
        %v627 = vunpack.c.h.b16 %v397
        %v628 = vunpack.c.l.b16 %v398
        %v629 = vunpack.c.h.b16 %v398
        %v630 = vunpack.c.l.b16 %v399
        %v631 = vunpack.c.h.b16 %v399
        %v632 = vunpack.c.l.b16 %v400
        %v633 = vunpack.c.h.b16 %v400
        %v634 = vunpack.c.l.b16 %v401
        %v635 = vunpack.c.h.b16 %v401
        %v636 = vunpack.c.l.b16 %v402
        %v637 = vunpack.c.h.b16 %v402
        %v638 = vpack.c.b16 %v590, %v566
        %v639 = vpack.c.b16 %v591, %v567
        %v640 = vpack.c.b16 %v592, %v568
        %v641 = vpack.c.b16 %v593, %v569
        %v642 = vpack.c.b16 %v594, %v570
        %v643 = vpack.c.b16 %v595, %v571
        %v644 = vpack.c.b16 %v596, %v572
        %v645 = vpack.c.b16 %v597, %v573
        %v646 = vpack.c.b16 %v598, %v574
        %v647 = vpack.c.b16 %v599, %v575
        %v648 = vpack.c.b16 %v600, %v576
        %v649 = vpack.c.b16 %v601, %v577
        %v650 = vpack.c.b16 %v602, %v578
        %v651 = vpack.c.b16 %v603, %v579
        %v652 = vpack.c.b16 %v604, %v580
        %v653 = vpack.c.b16 %v605, %v581
        %v654 = vpack.c.b16 %v606, %v582
        %v655 = vpack.c.b16 %v607, %v583
        %v656 = vpack.c.b16 %v608, %v584
        %v657 = vpack.c.b16 %v609, %v585
        %v658 = vpack.c.b16 %v610, %v586
        %v659 = vpack.c.b16 %v611, %v587
        %v660 = vpack.c.b16 %v612, %v588
        %v661 = vpack.c.b16 %v613, %v589
        %v662 = vpack.c.b16 %v614, %v614
        %v663 = vpack.c.b16 %v615, %v615
        %v664 = vpack.c.b16 %v616, %v616
        %v665 = vpack.c.b16 %v617, %v617
        %v666 = vpack.c.b16 %v618, %v618
        %v667 = vpack.c.b16 %v619, %v619
        %v668 = vpack.c.b16 %v620, %v620
        %v669 = vpack.c.b16 %v621, %v621
        %v670 = vpack.c.b16 %v622, %v622
        %v671 = vpack.c.b16 %v623, %v623
        %v672 = vpack.c.b16 %v624, %v624
        %v673 = vpack.c.b16 %v625, %v625
        %v674 = vpack.c.b16 %v626, %v626
        %v675 = vpack.c.b16 %v627, %v627
        %v676 = vpack.c.b16 %v628, %v628
        %v677 = vpack.c.b16 %v629, %v629
        %v678 = vpack.c.b16 %v630, %v630
        %v679 = vpack.c.b16 %v631, %v631
        %v680 = vpack.c.b16 %v632, %v632
        %v681 = vpack.c.b16 %v633, %v633
        %v682 = vpack.c.b16 %v634, %v634
        %v683 = vpack.c.b16 %v635, %v635
        %v684 = vpack.c.b16 %v636, %v636
        %v685 = vpack.c.b16 %v637, %v637
        %734 = vmatprep.subr.bf16.mxu0 %v639
        %735 = vmatpush1.bf16.xpose.msra.mxu0 %v638
        %736 = vmatprep.subr.bf16.mxu0 %v663
        %737 = vmatpush1.bf16.xpose.msra.mxu0 %v662
        %738 = vmatprep.subr.bf16.mxu0 0
        %739 = vmatpush1.bf16.xpose.msra.mxu0 0
        %740 = vmatprep.subr.bf16.mxu0 0
        %741 = vmatpush1.bf16.xpose.msra.mxu0 0
        %742 = vmatprep.subr.bf16.mxu0 0
        %743 = vmatpush1.bf16.xpose.msra.mxu0 0
        %744 = vmatprep.subr.bf16.mxu0 0
        %745 = vmatpush1.bf16.xpose.msra.mxu0 0
        %746 = vmatprep.subr.bf16.mxu0 0
        %747 = vmatpush1.bf16.xpose.msra.mxu0 0
        %748 = vmatprep.subr.bf16.mxu0 0
        %749 = vmatpush1.bf16.xpose.msra.mxu0 0
        %750 = vmatprep.subr.bf16.mxu0 0
        %751 = vmatpush1.bf16.xpose.msra.mxu0 0
        %752 = vmatprep.subr.bf16.mxu0 0
        %753 = vmatpush1.bf16.xpose.msra.mxu0 0
        %754 = vmatprep.subr.bf16.mxu0 0
        %755 = vmatpush1.bf16.xpose.msra.mxu0 0
        %756 = vmatprep.subr.bf16.mxu0 0
        %757 = vmatpush1.bf16.xpose.msra.mxu0 0
        %758 = vmatprep.subr.bf16.mxu0 0
        %759 = vmatpush1.bf16.xpose.msra.mxu0 0
        %760 = vmatprep.subr.bf16.mxu0 0
        %761 = vmatpush1.bf16.xpose.msra.mxu0 0
        %762 = vmatprep.subr.bf16.mxu0 0
        %763 = vmatpush1.bf16.xpose.msra.mxu0 0
        %764 = vmatprep.subr.bf16.mxu0 0
        %765 = vmatpush1.bf16.xpose.msra.mxu0 0
        %766 = vmatprep.mubr.bf16.mxu0 %v483
        %767 = vmatmul.mubr.bf16.gmra.mrb[0].mxu0 %v482
        %v768 = vpop.f32.mrb[0].mxu0
        %v769 = vadd.f32 %v408, %v768
        %v770 = vpop.f32.mrb[0].mxu0
        %v771 = vpop.f32.mrb[0].mxu0
        %v772 = vadd.f32 %v408, %v771
        %v773 = vpop.f32.mrb[0].mxu0
        %774 = vdwg.mxu0
        %775 = vmatprep.subr.bf16.mxu0 %v641
        %776 = vmatpush1.bf16.xpose.msra.mxu0 %v640
        %777 = vmatprep.subr.bf16.mxu0 %v665
        %778 = vmatpush1.bf16.xpose.msra.mxu0 %v664
        %779 = vmatprep.subr.bf16.mxu0 0
        %780 = vmatpush1.bf16.xpose.msra.mxu0 0
        %781 = vmatprep.subr.bf16.mxu0 0
        %782 = vmatpush1.bf16.xpose.msra.mxu0 0
        %783 = vmatprep.subr.bf16.mxu0 0
        %784 = vmatpush1.bf16.xpose.msra.mxu0 0
        %785 = vmatprep.subr.bf16.mxu0 0
        %786 = vmatpush1.bf16.xpose.msra.mxu0 0
        %787 = vmatprep.subr.bf16.mxu0 0
        %788 = vmatpush1.bf16.xpose.msra.mxu0 0
        %789 = vmatprep.subr.bf16.mxu0 0
        %790 = vmatpush1.bf16.xpose.msra.mxu0 0
        %791 = vmatprep.subr.bf16.mxu0 0
        %792 = vmatpush1.bf16.xpose.msra.mxu0 0
        %793 = vmatprep.subr.bf16.mxu0 0
        %794 = vmatpush1.bf16.xpose.msra.mxu0 0
        %795 = vmatprep.subr.bf16.mxu0 0
        %796 = vmatpush1.bf16.xpose.msra.mxu0 0
        %797 = vmatprep.subr.bf16.mxu0 0
        %798 = vmatpush1.bf16.xpose.msra.mxu0 0
        %799 = vmatprep.subr.bf16.mxu0 0
        %800 = vmatpush1.bf16.xpose.msra.mxu0 0
        %801 = vmatprep.subr.bf16.mxu0 0
        %802 = vmatpush1.bf16.xpose.msra.mxu0 0
        %803 = vmatprep.subr.bf16.mxu0 0
        %804 = vmatpush1.bf16.xpose.msra.mxu0 0
        %805 = vmatprep.subr.bf16.mxu0 0
        %806 = vmatpush1.bf16.xpose.msra.mxu0 0
        %807 = vmatprep.mubr.bf16.mxu0 %v485
        %808 = vmatmul.mubr.bf16.gmra.mrb[0].mxu0 %v484
        %v809 = vpop.f32.mrb[0].mxu0
        %v810 = vadd.f32 %v769, %v809
        %v811 = vpop.f32.mrb[0].mxu0
        %v812 = vpop.f32.mrb[0].mxu0
        %v813 = vadd.f32 %v772, %v812
        %v814 = vpop.f32.mrb[0].mxu0
        %815 = vdwg.mxu0
        %816 = vmatprep.subr.bf16.mxu0 %v643
        %817 = vmatpush1.bf16.xpose.msra.mxu0 %v642
        %818 = vmatprep.subr.bf16.mxu0 %v667
        %819 = vmatpush1.bf16.xpose.msra.mxu0 %v666
        %820 = vmatprep.subr.bf16.mxu0 0
        %821 = vmatpush1.bf16.xpose.msra.mxu0 0
        %822 = vmatprep.subr.bf16.mxu0 0
        %823 = vmatpush1.bf16.xpose.msra.mxu0 0
        %824 = vmatprep.subr.bf16.mxu0 0
        %825 = vmatpush1.bf16.xpose.msra.mxu0 0
        %826 = vmatprep.subr.bf16.mxu0 0
        %827 = vmatpush1.bf16.xpose.msra.mxu0 0
        %828 = vmatprep.subr.bf16.mxu0 0
        %829 = vmatpush1.bf16.xpose.msra.mxu0 0
        %830 = vmatprep.subr.bf16.mxu0 0
        %831 = vmatpush1.bf16.xpose.msra.mxu0 0
        %832 = vmatprep.subr.bf16.mxu0 0
        %833 = vmatpush1.bf16.xpose.msra.mxu0 0
        %834 = vmatprep.subr.bf16.mxu0 0
        %835 = vmatpush1.bf16.xpose.msra.mxu0 0
        %836 = vmatprep.subr.bf16.mxu0 0
        %837 = vmatpush1.bf16.xpose.msra.mxu0 0
        %838 = vmatprep.subr.bf16.mxu0 0
        %839 = vmatpush1.bf16.xpose.msra.mxu0 0
        %840 = vmatprep.subr.bf16.mxu0 0
        %841 = vmatpush1.bf16.xpose.msra.mxu0 0
        %842 = vmatprep.subr.bf16.mxu0 0
        %843 = vmatpush1.bf16.xpose.msra.mxu0 0
        %844 = vmatprep.subr.bf16.mxu0 0
        %845 = vmatpush1.bf16.xpose.msra.mxu0 0
        %846 = vmatprep.subr.bf16.mxu0 0
        %847 = vmatpush1.bf16.xpose.msra.mxu0 0
        %848 = vmatprep.mubr.bf16.mxu0 %v487
        %849 = vmatmul.mubr.bf16.gmra.mrb[0].mxu0 %v486
        %v850 = vpop.f32.mrb[0].mxu0
        %v851 = vadd.f32 %v810, %v850
        %v852 = vpop.f32.mrb[0].mxu0
        %v853 = vpop.f32.mrb[0].mxu0
        %v854 = vadd.f32 %v813, %v853
        %v855 = vpop.f32.mrb[0].mxu0
        %856 = vdwg.mxu0
        %857 = vmatprep.subr.bf16.mxu0 %v645
        %858 = vmatpush1.bf16.xpose.msra.mxu0 %v644
        %859 = vmatprep.subr.bf16.mxu0 %v669
        %860 = vmatpush1.bf16.xpose.msra.mxu0 %v668
        %861 = vmatprep.subr.bf16.mxu0 0
        %862 = vmatpush1.bf16.xpose.msra.mxu0 0
        %863 = vmatprep.subr.bf16.mxu0 0
        %864 = vmatpush1.bf16.xpose.msra.mxu0 0
        %865 = vmatprep.subr.bf16.mxu0 0
        %866 = vmatpush1.bf16.xpose.msra.mxu0 0
        %867 = vmatprep.subr.bf16.mxu0 0
        %868 = vmatpush1.bf16.xpose.msra.mxu0 0
        %869 = vmatprep.subr.bf16.mxu0 0
        %870 = vmatpush1.bf16.xpose.msra.mxu0 0
        %871 = vmatprep.subr.bf16.mxu0 0
        %872 = vmatpush1.bf16.xpose.msra.mxu0 0
        %873 = vmatprep.subr.bf16.mxu0 0
        %874 = vmatpush1.bf16.xpose.msra.mxu0 0
        %875 = vmatprep.subr.bf16.mxu0 0
        %876 = vmatpush1.bf16.xpose.msra.mxu0 0
        %877 = vmatprep.subr.bf16.mxu0 0
        %878 = vmatpush1.bf16.xpose.msra.mxu0 0
        %879 = vmatprep.subr.bf16.mxu0 0
        %880 = vmatpush1.bf16.xpose.msra.mxu0 0
        %881 = vmatprep.subr.bf16.mxu0 0
        %882 = vmatpush1.bf16.xpose.msra.mxu0 0
        %883 = vmatprep.subr.bf16.mxu0 0
        %884 = vmatpush1.bf16.xpose.msra.mxu0 0
        %885 = vmatprep.subr.bf16.mxu0 0
        %886 = vmatpush1.bf16.xpose.msra.mxu0 0
        %887 = vmatprep.subr.bf16.mxu0 0
        %888 = vmatpush1.bf16.xpose.msra.mxu0 0
        %889 = vmatprep.mubr.bf16.mxu0 %v489
        %890 = vmatmul.mubr.bf16.gmra.mrb[0].mxu0 %v488
        %v891 = vpop.f32.mrb[0].mxu0
        %v892 = vadd.f32 %v851, %v891
        %v893 = vpop.f32.mrb[0].mxu0
        %v894 = vpop.f32.mrb[0].mxu0
        %v895 = vadd.f32 %v854, %v894
        %v896 = vpop.f32.mrb[0].mxu0
        %897 = vdwg.mxu0
        %898 = vmatprep.subr.bf16.mxu0 %v647
        %899 = vmatpush1.bf16.xpose.msra.mxu0 %v646
        %900 = vmatprep.subr.bf16.mxu0 %v671
        %901 = vmatpush1.bf16.xpose.msra.mxu0 %v670
        %902 = vmatprep.subr.bf16.mxu0 0
        %903 = vmatpush1.bf16.xpose.msra.mxu0 0
        %904 = vmatprep.subr.bf16.mxu0 0
        %905 = vmatpush1.bf16.xpose.msra.mxu0 0
        %906 = vmatprep.subr.bf16.mxu0 0
        %907 = vmatpush1.bf16.xpose.msra.mxu0 0
        %908 = vmatprep.subr.bf16.mxu0 0
        %909 = vmatpush1.bf16.xpose.msra.mxu0 0
        %910 = vmatprep.subr.bf16.mxu0 0
        %911 = vmatpush1.bf16.xpose.msra.mxu0 0
        %912 = vmatprep.subr.bf16.mxu0 0
        %913 = vmatpush1.bf16.xpose.msra.mxu0 0
        %914 = vmatprep.subr.bf16.mxu0 0
        %915 = vmatpush1.bf16.xpose.msra.mxu0 0
        %916 = vmatprep.subr.bf16.mxu0 0
        %917 = vmatpush1.bf16.xpose.msra.mxu0 0
        %918 = vmatprep.subr.bf16.mxu0 0
        %919 = vmatpush1.bf16.xpose.msra.mxu0 0
        %920 = vmatprep.subr.bf16.mxu0 0
        %921 = vmatpush1.bf16.xpose.msra.mxu0 0
        %922 = vmatprep.subr.bf16.mxu0 0
        %923 = vmatpush1.bf16.xpose.msra.mxu0 0
        %924 = vmatprep.subr.bf16.mxu0 0
        %925 = vmatpush1.bf16.xpose.msra.mxu0 0
        %926 = vmatprep.subr.bf16.mxu0 0
        %927 = vmatpush1.bf16.xpose.msra.mxu0 0
        %928 = vmatprep.subr.bf16.mxu0 0
        %929 = vmatpush1.bf16.xpose.msra.mxu0 0
        %930 = vmatprep.mubr.bf16.mxu0 %v491
        %931 = vmatmul.mubr.bf16.gmra.mrb[0].mxu0 %v490
        %v932 = vpop.f32.mrb[0].mxu0
        %v933 = vadd.f32 %v892, %v932
        %v934 = vpop.f32.mrb[0].mxu0
        %v935 = vpop.f32.mrb[0].mxu0
        %v936 = vadd.f32 %v895, %v935
        %v937 = vpop.f32.mrb[0].mxu0
        %938 = vdwg.mxu0
        %939 = vmatprep.subr.bf16.mxu0 %v649
        %940 = vmatpush1.bf16.xpose.msra.mxu0 %v648
        %941 = vmatprep.subr.bf16.mxu0 %v673
        %942 = vmatpush1.bf16.xpose.msra.mxu0 %v672
        %943 = vmatprep.subr.bf16.mxu0 0
        %944 = vmatpush1.bf16.xpose.msra.mxu0 0
        %945 = vmatprep.subr.bf16.mxu0 0
        %946 = vmatpush1.bf16.xpose.msra.mxu0 0
        %947 = vmatprep.subr.bf16.mxu0 0
        %948 = vmatpush1.bf16.xpose.msra.mxu0 0
        %949 = vmatprep.subr.bf16.mxu0 0
        %950 = vmatpush1.bf16.xpose.msra.mxu0 0
        %951 = vmatprep.subr.bf16.mxu0 0
        %952 = vmatpush1.bf16.xpose.msra.mxu0 0
        %953 = vmatprep.subr.bf16.mxu0 0
        %954 = vmatpush1.bf16.xpose.msra.mxu0 0
        %955 = vmatprep.subr.bf16.mxu0 0
        %956 = vmatpush1.bf16.xpose.msra.mxu0 0
        %957 = vmatprep.subr.bf16.mxu0 0
        %958 = vmatpush1.bf16.xpose.msra.mxu0 0
        %959 = vmatprep.subr.bf16.mxu0 0
        %960 = vmatpush1.bf16.xpose.msra.mxu0 0
        %961 = vmatprep.subr.bf16.mxu0 0
        %962 = vmatpush1.bf16.xpose.msra.mxu0 0
        %963 = vmatprep.subr.bf16.mxu0 0
        %964 = vmatpush1.bf16.xpose.msra.mxu0 0
        %965 = vmatprep.subr.bf16.mxu0 0
        %966 = vmatpush1.bf16.xpose.msra.mxu0 0
        %967 = vmatprep.subr.bf16.mxu0 0
        %968 = vmatpush1.bf16.xpose.msra.mxu0 0
        %969 = vmatprep.subr.bf16.mxu0 0
        %970 = vmatpush1.bf16.xpose.msra.mxu0 0
        %971 = vmatprep.mubr.bf16.mxu0 %v493
        %972 = vmatmul.mubr.bf16.gmra.mrb[0].mxu0 %v492
        %v973 = vpop.f32.mrb[0].mxu0
        %v974 = vadd.f32 %v933, %v973
        %v975 = vpop.f32.mrb[0].mxu0
        %v976 = vpop.f32.mrb[0].mxu0
        %v977 = vadd.f32 %v936, %v976
        %v978 = vpop.f32.mrb[0].mxu0
        %979 = vdwg.mxu0
        %980 = vmatprep.subr.bf16.mxu0 %v651
        %981 = vmatpush1.bf16.xpose.msra.mxu0 %v650
        %982 = vmatprep.subr.bf16.mxu0 %v675
        %983 = vmatpush1.bf16.xpose.msra.mxu0 %v674
        %984 = vmatprep.subr.bf16.mxu0 0
        %985 = vmatpush1.bf16.xpose.msra.mxu0 0
        %986 = vmatprep.subr.bf16.mxu0 0
        %987 = vmatpush1.bf16.xpose.msra.mxu0 0
        %988 = vmatprep.subr.bf16.mxu0 0
        %989 = vmatpush1.bf16.xpose.msra.mxu0 0
        %990 = vmatprep.subr.bf16.mxu0 0
        %991 = vmatpush1.bf16.xpose.msra.mxu0 0
        %992 = vmatprep.subr.bf16.mxu0 0
        %993 = vmatpush1.bf16.xpose.msra.mxu0 0
        %994 = vmatprep.subr.bf16.mxu0 0
        %995 = vmatpush1.bf16.xpose.msra.mxu0 0
        %996 = vmatprep.subr.bf16.mxu0 0
        %997 = vmatpush1.bf16.xpose.msra.mxu0 0
        %998 = vmatprep.subr.bf16.mxu0 0
        %999 = vmatpush1.bf16.xpose.msra.mxu0 0
        %1000 = vmatprep.subr.bf16.mxu0 0
        %1001 = vmatpush1.bf16.xpose.msra.mxu0 0
        %1002 = vmatprep.subr.bf16.mxu0 0
        %1003 = vmatpush1.bf16.xpose.msra.mxu0 0
        %1004 = vmatprep.subr.bf16.mxu0 0
        %1005 = vmatpush1.bf16.xpose.msra.mxu0 0
        %1006 = vmatprep.subr.bf16.mxu0 0
        %1007 = vmatpush1.bf16.xpose.msra.mxu0 0
        %1008 = vmatprep.subr.bf16.mxu0 0
        %1009 = vmatpush1.bf16.xpose.msra.mxu0 0
        %1010 = vmatprep.subr.bf16.mxu0 0
        %1011 = vmatpush1.bf16.xpose.msra.mxu0 0
        %1012 = vmatprep.mubr.bf16.mxu0 %v495
        %1013 = vmatmul.mubr.bf16.gmra.mrb[0].mxu0 %v494
        %v1014 = vpop.f32.mrb[0].mxu0
        %v1015 = vadd.f32 %v974, %v1014
        %v1016 = vpop.f32.mrb[0].mxu0
        %v1017 = vpop.f32.mrb[0].mxu0
        %v1018 = vadd.f32 %v977, %v1017
        %v1019 = vpop.f32.mrb[0].mxu0
        %1020 = vdwg.mxu0
        %1021 = vmatprep.subr.bf16.mxu0 %v653
        %1022 = vmatpush1.bf16.xpose.msra.mxu0 %v652
        %1023 = vmatprep.subr.bf16.mxu0 %v677
        %1024 = vmatpush1.bf16.xpose.msra.mxu0 %v676
        %1025 = vmatprep.subr.bf16.mxu0 0
        %1026 = vmatpush1.bf16.xpose.msra.mxu0 0
        %1027 = vmatprep.subr.bf16.mxu0 0
        %1028 = vmatpush1.bf16.xpose.msra.mxu0 0
        %1029 = vmatprep.subr.bf16.mxu0 0
        %1030 = vmatpush1.bf16.xpose.msra.mxu0 0
        %1031 = vmatprep.subr.bf16.mxu0 0
        %1032 = vmatpush1.bf16.xpose.msra.mxu0 0
        %1033 = vmatprep.subr.bf16.mxu0 0
        %1034 = vmatpush1.bf16.xpose.msra.mxu0 0
        %1035 = vmatprep.subr.bf16.mxu0 0
        %1036 = vmatpush1.bf16.xpose.msra.mxu0 0
        %1037 = vmatprep.subr.bf16.mxu0 0
        %1038 = vmatpush1.bf16.xpose.msra.mxu0 0
        %1039 = vmatprep.subr.bf16.mxu0 0
        %1040 = vmatpush1.bf16.xpose.msra.mxu0 0
        %1041 = vmatprep.subr.bf16.mxu0 0
        %1042 = vmatpush1.bf16.xpose.msra.mxu0 0
        %1043 = vmatprep.subr.bf16.mxu0 0
        %1044 = vmatpush1.bf16.xpose.msra.mxu0 0
        %1045 = vmatprep.subr.bf16.mxu0 0
        %1046 = vmatpush1.bf16.xpose.msra.mxu0 0
        %1047 = vmatprep.subr.bf16.mxu0 0
        %1048 = vmatpush1.bf16.xpose.msra.mxu0 0
        %1049 = vmatprep.subr.bf16.mxu0 0
        %1050 = vmatpush1.bf16.xpose.msra.mxu0 0
        %1051 = vmatprep.subr.bf16.mxu0 0
        %1052 = vmatpush1.bf16.xpose.msra.mxu0 0
        %1053 = vmatprep.mubr.bf16.mxu0 %v497
        %1054 = vmatmul.mubr.bf16.gmra.mrb[0].mxu0 %v496
        %v1055 = vpop.f32.mrb[0].mxu0
        %v1056 = vadd.f32 %v1015, %v1055
        %v1057 = vpop.f32.mrb[0].mxu0
        %v1058 = vpop.f32.mrb[0].mxu0
        %v1059 = vadd.f32 %v1018, %v1058
        %v1060 = vpop.f32.mrb[0].mxu0
        %1061 = vdwg.mxu0
        %1062 = vmatprep.subr.bf16.mxu0 %v655
        %1063 = vmatpush1.bf16.xpose.msra.mxu0 %v654
        %1064 = vmatprep.subr.bf16.mxu0 %v679
        %1065 = vmatpush1.bf16.xpose.msra.mxu0 %v678
        %1066 = vmatprep.subr.bf16.mxu0 0
        %1067 = vmatpush1.bf16.xpose.msra.mxu0 0
        %1068 = vmatprep.subr.bf16.mxu0 0
        %1069 = vmatpush1.bf16.xpose.msra.mxu0 0
        %1070 = vmatprep.subr.bf16.mxu0 0
        %1071 = vmatpush1.bf16.xpose.msra.mxu0 0
        %1072 = vmatprep.subr.bf16.mxu0 0
        %1073 = vmatpush1.bf16.xpose.msra.mxu0 0
        %1074 = vmatprep.subr.bf16.mxu0 0
        %1075 = vmatpush1.bf16.xpose.msra.mxu0 0
        %1076 = vmatprep.subr.bf16.mxu0 0
        %1077 = vmatpush1.bf16.xpose.msra.mxu0 0
        %1078 = vmatprep.subr.bf16.mxu0 0
        %1079 = vmatpush1.bf16.xpose.msra.mxu0 0
        %1080 = vmatprep.subr.bf16.mxu0 0
        %1081 = vmatpush1.bf16.xpose.msra.mxu0 0
        %1082 = vmatprep.subr.bf16.mxu0 0
        %1083 = vmatpush1.bf16.xpose.msra.mxu0 0
        %1084 = vmatprep.subr.bf16.mxu0 0
        %1085 = vmatpush1.bf16.xpose.msra.mxu0 0
        %1086 = vmatprep.subr.bf16.mxu0 0
        %1087 = vmatpush1.bf16.xpose.msra.mxu0 0
        %1088 = vmatprep.subr.bf16.mxu0 0
        %1089 = vmatpush1.bf16.xpose.msra.mxu0 0
        %1090 = vmatprep.subr.bf16.mxu0 0
        %1091 = vmatpush1.bf16.xpose.msra.mxu0 0
        %1092 = vmatprep.subr.bf16.mxu0 0
        %1093 = vmatpush1.bf16.xpose.msra.mxu0 0
        %1094 = vmatprep.mubr.bf16.mxu0 %v499
        %1095 = vmatmul.mubr.bf16.gmra.mrb[0].mxu0 %v498
        %v1096 = vpop.f32.mrb[0].mxu0
        %v1097 = vadd.f32 %v1056, %v1096
        %v1098 = vpop.f32.mrb[0].mxu0
        %v1099 = vpop.f32.mrb[0].mxu0
        %v1100 = vadd.f32 %v1059, %v1099
        %v1101 = vpop.f32.mrb[0].mxu0
        %1102 = vdwg.mxu0
        %1103 = vmatprep.subr.bf16.mxu0 %v657
        %1104 = vmatpush1.bf16.xpose.msra.mxu0 %v656
        %1105 = vmatprep.subr.bf16.mxu0 %v681
        %1106 = vmatpush1.bf16.xpose.msra.mxu0 %v680
        %1107 = vmatprep.subr.bf16.mxu0 0
        %1108 = vmatpush1.bf16.xpose.msra.mxu0 0
        %1109 = vmatprep.subr.bf16.mxu0 0
        %1110 = vmatpush1.bf16.xpose.msra.mxu0 0
        %1111 = vmatprep.subr.bf16.mxu0 0
        %1112 = vmatpush1.bf16.xpose.msra.mxu0 0
        %1113 = vmatprep.subr.bf16.mxu0 0
        %1114 = vmatpush1.bf16.xpose.msra.mxu0 0
        %1115 = vmatprep.subr.bf16.mxu0 0
        %1116 = vmatpush1.bf16.xpose.msra.mxu0 0
        %1117 = vmatprep.subr.bf16.mxu0 0
        %1118 = vmatpush1.bf16.xpose.msra.mxu0 0
        %1119 = vmatprep.subr.bf16.mxu0 0
        %1120 = vmatpush1.bf16.xpose.msra.mxu0 0
        %1121 = vmatprep.subr.bf16.mxu0 0
        %1122 = vmatpush1.bf16.xpose.msra.mxu0 0
        %1123 = vmatprep.subr.bf16.mxu0 0
        %1124 = vmatpush1.bf16.xpose.msra.mxu0 0
        %1125 = vmatprep.subr.bf16.mxu0 0
        %1126 = vmatpush1.bf16.xpose.msra.mxu0 0
        %1127 = vmatprep.subr.bf16.mxu0 0
        %1128 = vmatpush1.bf16.xpose.msra.mxu0 0
        %1129 = vmatprep.subr.bf16.mxu0 0
        %1130 = vmatpush1.bf16.xpose.msra.mxu0 0
        %1131 = vmatprep.subr.bf16.mxu0 0
        %1132 = vmatpush1.bf16.xpose.msra.mxu0 0
        %1133 = vmatprep.subr.bf16.mxu0 0
        %1134 = vmatpush1.bf16.xpose.msra.mxu0 0
        %1135 = vmatprep.mubr.bf16.mxu0 %v501
        %1136 = vmatmul.mubr.bf16.gmra.mrb[0].mxu0 %v500
        %v1137 = vpop.f32.mrb[0].mxu0
        %v1138 = vadd.f32 %v1097, %v1137
        %v1139 = vpop.f32.mrb[0].mxu0
        %v1140 = vpop.f32.mrb[0].mxu0
        %v1141 = vadd.f32 %v1100, %v1140
        %v1142 = vpop.f32.mrb[0].mxu0
        %1143 = vdwg.mxu0
        %1144 = vmatprep.subr.bf16.mxu0 %v659
        %1145 = vmatpush1.bf16.xpose.msra.mxu0 %v658
        %1146 = vmatprep.subr.bf16.mxu0 %v683
        %1147 = vmatpush1.bf16.xpose.msra.mxu0 %v682
        %1148 = vmatprep.subr.bf16.mxu0 0
        %1149 = vmatpush1.bf16.xpose.msra.mxu0 0
        %1150 = vmatprep.subr.bf16.mxu0 0
        %1151 = vmatpush1.bf16.xpose.msra.mxu0 0
        %1152 = vmatprep.subr.bf16.mxu0 0
        %1153 = vmatpush1.bf16.xpose.msra.mxu0 0
        %1154 = vmatprep.subr.bf16.mxu0 0
        %1155 = vmatpush1.bf16.xpose.msra.mxu0 0
        %1156 = vmatprep.subr.bf16.mxu0 0
        %1157 = vmatpush1.bf16.xpose.msra.mxu0 0
        %1158 = vmatprep.subr.bf16.mxu0 0
        %1159 = vmatpush1.bf16.xpose.msra.mxu0 0
        %1160 = vmatprep.subr.bf16.mxu0 0
        %1161 = vmatpush1.bf16.xpose.msra.mxu0 0
        %1162 = vmatprep.subr.bf16.mxu0 0
        %1163 = vmatpush1.bf16.xpose.msra.mxu0 0
        %1164 = vmatprep.subr.bf16.mxu0 0
        %1165 = vmatpush1.bf16.xpose.msra.mxu0 0
        %1166 = vmatprep.subr.bf16.mxu0 0
        %1167 = vmatpush1.bf16.xpose.msra.mxu0 0
        %1168 = vmatprep.subr.bf16.mxu0 0
        %1169 = vmatpush1.bf16.xpose.msra.mxu0 0
        %1170 = vmatprep.subr.bf16.mxu0 0
        %1171 = vmatpush1.bf16.xpose.msra.mxu0 0
        %1172 = vmatprep.subr.bf16.mxu0 0
        %1173 = vmatpush1.bf16.xpose.msra.mxu0 0
        %1174 = vmatprep.subr.bf16.mxu0 0
        %1175 = vmatpush1.bf16.xpose.msra.mxu0 0
        %1176 = vmatprep.mubr.bf16.mxu0 %v503
        %1177 = vmatmul.mubr.bf16.gmra.mrb[0].mxu0 %v502
        %v1178 = vpop.f32.mrb[0].mxu0
        %v1179 = vadd.f32 %v1138, %v1178
        %v1180 = vpop.f32.mrb[0].mxu0
        %v1181 = vpop.f32.mrb[0].mxu0
        %v1182 = vadd.f32 %v1141, %v1181
        %v1183 = vpop.f32.mrb[0].mxu0
        %1184 = vdwg.mxu0
        %1185 = vmatprep.subr.bf16.mxu0 %v661
        %1186 = vmatpush1.bf16.xpose.msra.mxu0 %v660
        %1187 = vmatprep.subr.bf16.mxu0 %v685
        %1188 = vmatpush1.bf16.xpose.msra.mxu0 %v684
        %1189 = vmatprep.subr.bf16.mxu0 0
        %1190 = vmatpush1.bf16.xpose.msra.mxu0 0
        %1191 = vmatprep.subr.bf16.mxu0 0
        %1192 = vmatpush1.bf16.xpose.msra.mxu0 0
        %1193 = vmatprep.subr.bf16.mxu0 0
        %1194 = vmatpush1.bf16.xpose.msra.mxu0 0
        %1195 = vmatprep.subr.bf16.mxu0 0
        %1196 = vmatpush1.bf16.xpose.msra.mxu0 0
        %1197 = vmatprep.subr.bf16.mxu0 0
        %1198 = vmatpush1.bf16.xpose.msra.mxu0 0
        %1199 = vmatprep.subr.bf16.mxu0 0
        %1200 = vmatpush1.bf16.xpose.msra.mxu0 0
        %1201 = vmatprep.subr.bf16.mxu0 0
        %1202 = vmatpush1.bf16.xpose.msra.mxu0 0
        %1203 = vmatprep.subr.bf16.mxu0 0
        %1204 = vmatpush1.bf16.xpose.msra.mxu0 0
        %1205 = vmatprep.subr.bf16.mxu0 0
        %1206 = vmatpush1.bf16.xpose.msra.mxu0 0
        %1207 = vmatprep.subr.bf16.mxu0 0
        %1208 = vmatpush1.bf16.xpose.msra.mxu0 0
        %1209 = vmatprep.subr.bf16.mxu0 0
        %1210 = vmatpush1.bf16.xpose.msra.mxu0 0
        %1211 = vmatprep.subr.bf16.mxu0 0
        %1212 = vmatpush1.bf16.xpose.msra.mxu0 0
        %1213 = vmatprep.subr.bf16.mxu0 0
        %1214 = vmatpush1.bf16.xpose.msra.mxu0 0
        %1215 = vmatprep.subr.bf16.mxu0 0
        %1216 = vmatpush1.bf16.xpose.msra.mxu0 0
        %1217 = vmatprep.mubr.bf16.mxu0 %v505
        %1218 = vmatmul.mubr.bf16.gmra.mrb[0].mxu0 %v504
        %v1219 = vpop.f32.mrb[0].mxu0
        %v1220 = vadd.f32 %v1179, %v1219
        %v1221 = vpop.f32.mrb[0].mxu0
        %v1222 = vpop.f32.mrb[0].mxu0
        %v1223 = vadd.f32 %v1182, %v1222
        %v1224 = vpop.f32.mrb[0].mxu0
        %1225 = vdwg.mxu0
        %vm1226 = vcmask 80896
        %v1227 = vsel %vm1226, %v1220, -inf
        %1228 = vmax.xlane.f32.xlu0 %v1227
        %v1229 = vpop.xlane.xlu0 %1228
        %vm1230 = vcmask 74752
        %v1231 = vsel %vm1230, %v1223, -inf
        %1232 = vmax.xlane.f32.xlu0 %v1231
        %v1233 = vpop.xlane.xlu0 %1232
        %v1234 = vsub.f32 %v1220, %v1229
        %v1235 = vsub.f32 %v1223, %v1233
        %v1236 = vmul.f32 %v1234, 1.442695
        %v1237 = vpow.pop %v1236
        %v1238 = vmul.f32 %v1235, 1.442695
        %v1239 = vpow.pop %v1238
        %v1240 = vsel %vm1226, %v1237, 0.0
        %1241 = vadd.xlane.f32.xlu0 %v1240
        %v1242 = vpop.xlane.xlu0 %1241
        %v1243 = vsel %vm1230, %v1239, 0.0
        %1244 = vadd.xlane.f32.xlu0 %v1243
        %v1245 = vpop.xlane.xlu0 %1244
        %v1246 = vrcp.pop %v1242
        %v1247 = vmul.f32 %v1237, %v1246
        %v1248 = vrcp.pop %v1245
        %v1249 = vmul.f32 %v1239, %v1248
        %v1250 = vmul.f32 %v1247, %v1247
        %v1251 = vmul.f32 %v1249, %v1249
        %v1252 = vsel %vm1226, %v1250, 0.0
        %1253 = vadd.xlane.f32.xlu0 %v1252
        %v1254 = vpop.xlane.xlu0 %1253
        %v1255 = vsel %vm1230, %v1251, 0.0
        %1256 = vadd.xlane.f32.xlu0 %v1255
        %v1257 = vpop.xlane.xlu0 %1256
        %v1258 = vrsqrt.pop %v1254
        %v1259 = vmul.f32 %v1254, %v1258
        %vm1260 = vcmp.eq.f32.partialorder %v1254, inf
        %v1261 = vsel %vm1260, %v1254, %v1259
        %vm1262 = vcmp.eq.f32.partialorder %v1254, 0.0
        %v1263 = vand.u32 %v1254, 2147483648
        %v1264 = vsel %vm1262, %v1263, %v1261
        %v1265 = vrsqrt.pop %v1257
        %v1266 = vmul.f32 %v1257, %v1265
        %vm1267 = vcmp.eq.f32.partialorder %v1257, inf
        %v1268 = vsel %vm1267, %v1257, %v1266
        %vm1269 = vcmp.eq.f32.partialorder %v1257, 0.0
        %v1270 = vand.u32 %v1257, 2147483648
        %v1271 = vsel %vm1269, %v1270, %v1268
        %v1272 = vmax.f32 %v1264, 1e-08
        %v1273 = vmax.f32 %v1271, 1e-08
        %v1274 = vrcp.pop %v1272
        %v1275 = vrcp.pop %v1273
        %v1276 = vmul.f32 %v1247, %v1274
        %v1277 = vmul.f32 %v1249, %v1275
        %vm1278 = vcmask 162896
        %v1279 = vsel %vm1278, %v1220, -inf
        %1280 = vmax.xlane.f32.xlu0 %v1279
        %v1281 = vpop.xlane.xlu0 %1280
        %vm1282 = vcmask 156752
        %v1283 = vsel %vm1282, %v1223, -inf
        %1284 = vmax.xlane.f32.xlu0 %v1283
        %v1285 = vpop.xlane.xlu0 %1284
        %v1286 = vsub.f32 %v1220, %v1281
        %v1287 = vsub.f32 %v1223, %v1285
        %v1288 = vmul.f32 %v1286, 1.442695
        %v1289 = vpow.pop %v1288
        %v1290 = vmul.f32 %v1287, 1.442695
        %v1291 = vpow.pop %v1290
        %1294 = vrot.lane.b32.xlu0 %v1289, 118
        %v1295 = vpop.permute.xlu0 %1294
        %1296 = vrot.lane.b32.xlu0 %v1291, 118
        %v1297 = vpop.permute.xlu0 %1296
        %v1300 = vsel %vm1226, %v1295, 0.0
        %1301 = vadd.xlane.f32.xlu0 %v1300
        %v1302 = vpop.xlane.xlu0 %1301
        %v1303 = vsel %vm1230, %v1297, 0.0
        %1304 = vadd.xlane.f32.xlu0 %v1303
        %v1305 = vpop.xlane.xlu0 %1304
        %v1306 = vrcp.pop %v1302
        %v1307 = vmul.f32 %v1289, %v1306
        %v1308 = vrcp.pop %v1305
        %v1309 = vmul.f32 %v1291, %v1308
        %v1310 = vmul.f32 %v1307, %v1307
        %v1311 = vmul.f32 %v1309, %v1309
        %1314 = vrot.lane.b32.xlu0 %v1310, 118
        %v1315 = vpop.permute.xlu0 %1314
        %1316 = vrot.lane.b32.xlu0 %v1311, 118
        %v1317 = vpop.permute.xlu0 %1316
        %v1320 = vsel %vm1226, %v1315, 0.0
        %1321 = vadd.xlane.f32.xlu0 %v1320
        %v1322 = vpop.xlane.xlu0 %1321
        %v1323 = vsel %vm1230, %v1317, 0.0
        %1324 = vadd.xlane.f32.xlu0 %v1323
        %v1325 = vpop.xlane.xlu0 %1324
        %v1326 = vrsqrt.pop %v1322
        %v1327 = vmul.f32 %v1322, %v1326
        %vm1328 = vcmp.eq.f32.partialorder %v1322, inf
        %v1329 = vsel %vm1328, %v1322, %v1327
        %vm1330 = vcmp.eq.f32.partialorder %v1322, 0.0
        %v1331 = vand.u32 %v1322, 2147483648
        %v1332 = vsel %vm1330, %v1331, %v1329
        %v1333 = vrsqrt.pop %v1325
        %v1334 = vmul.f32 %v1325, %v1333
        %vm1335 = vcmp.eq.f32.partialorder %v1325, inf
        %v1336 = vsel %vm1335, %v1325, %v1334
        %vm1337 = vcmp.eq.f32.partialorder %v1325, 0.0
        %v1338 = vand.u32 %v1325, 2147483648
        %v1339 = vsel %vm1337, %v1338, %v1336
        %v1340 = vmax.f32 %v1332, 1e-08
        %v1341 = vmax.f32 %v1339, 1e-08
        %v1342 = vrcp.pop %v1340
        %v1343 = vrcp.pop %v1341
        %v1344 = vmul.f32 %v1307, %v1342
        %v1345 = vmul.f32 %v1309, %v1343
        %v1347 = vsel %vm1226, %v1276, 0
        %v1350 = vsel %vm1226, %v1277, 0
        %1352 = vmatprep.subr.mxu0 0.0
        %1353 = vmatpush1.xpose.msra.mxu0 %v1347
        %1354 = vmatprep.subr.mxu0 0.0
        %1355 = vmatpush1.xpose.msra.mxu0 %v1350
        %1356 = vmatprep.subr.mxu0 0.0
        %1357 = vmatpush1.xpose.msra.mxu0 0.0
        %1358 = vmatprep.subr.mxu0 0.0
        %1359 = vmatpush1.xpose.msra.mxu0 0.0
        %1360 = vmatprep.subr.mxu0 0.0
        %1361 = vmatpush1.xpose.msra.mxu0 0.0
        %1362 = vmatprep.subr.mxu0 0.0
        %1363 = vmatpush1.xpose.msra.mxu0 0.0
        %1364 = vmatprep.subr.mxu0 0.0
        %1365 = vmatpush1.xpose.msra.mxu0 0.0
        %1366 = vmatprep.subr.mxu0 0.0
        %1367 = vmatpush1.xpose.msra.mxu0 0.0
        %1368 = vmatprep.subr.mxu0 0.0
        %1369 = vmatpush1.xpose.msra.mxu0 0.0
        %1370 = vmatprep.subr.mxu0 0.0
        %1371 = vmatpush1.xpose.msra.mxu0 0.0
        %1372 = vmatprep.subr.mxu0 0.0
        %1373 = vmatpush1.xpose.msra.mxu0 0.0
        %1374 = vmatprep.subr.mxu0 0.0
        %1375 = vmatpush1.xpose.msra.mxu0 0.0
        %1376 = vmatprep.subr.mxu0 0.0
        %1377 = vmatpush1.xpose.msra.mxu0 0.0
        %1378 = vmatprep.subr.mxu0 0.0
        %1379 = vmatpush1.xpose.msra.mxu0 0.0
        %1380 = vmatprep.subr.mxu0 0.0
        %1381 = vmatpush1.xpose.msra.mxu0 0.0
        %1382 = vmatprep.subr.mxu0 0.0
        %1383 = vmatpush1.xpose.msra.mxu0 0.0
        %1384 = vmatprep.subr.mxu0 0.0
        %1385 = vmatpush1.xpose.msra.mxu0 0.0
        %1386 = vmatprep.subr.mxu0 0.0
        %1387 = vmatpush1.xpose.msra.mxu0 0.0
        %1388 = vmatprep.subr.mxu0 0.0
        %1389 = vmatpush1.xpose.msra.mxu0 0.0
        %1390 = vmatprep.subr.mxu0 0.0
        %1391 = vmatpush1.xpose.msra.mxu0 0.0
        %1392 = vmatprep.subr.mxu0 0.0
        %1393 = vmatpush1.xpose.msra.mxu0 0.0
        %1394 = vmatprep.subr.mxu0 0.0
        %1395 = vmatpush1.xpose.msra.mxu0 0.0
        %1396 = vmatprep.subr.mxu0 0.0
        %1397 = vmatpush1.xpose.msra.mxu0 0.0
        %1398 = vmatprep.subr.mxu0 0.0
        %1399 = vmatpush1.xpose.msra.mxu0 0.0
        %1400 = vmatprep.subr.mxu0 0.0
        %1401 = vmatpush1.xpose.msra.mxu0 0.0
        %1402 = vmatprep.subr.mxu0 0.0
        %1403 = vmatpush1.xpose.msra.mxu0 0.0
        %1404 = vmatprep.subr.mxu0 0.0
        %1405 = vmatpush1.xpose.msra.mxu0 0.0
        %1406 = vmatprep.subr.mxu0 0.0
        %1407 = vmatpush1.xpose.msra.mxu0 0.0
        %1408 = vmatprep.subr.mxu0 0.0
        %1409 = vmatpush1.xpose.msra.mxu0 0.0
        %1410 = vmatprep.subr.mxu0 0.0
        %1411 = vmatpush1.xpose.msra.mxu0 0.0
        %1412 = vmatprep.subr.mxu0 0.0
        %1413 = vmatpush1.xpose.msra.mxu0 0.0
        %1414 = vmatprep.subr.mxu0 0.0
        %1415 = vmatpush1.xpose.msra.mxu0 0.0
        %1416 = vmatprep.mubr.f32.mxu0 0.0
        %1417 = vmatmul.mubr.f32.gmra.mrb[0].mxu0 %v1347
        %v1418 = vpop.f32.mrb[0].mxu0
        %v1419 = vadd.f32 0.0, %v1418
        %v1420 = vpop.f32.mrb[0].mxu0
        %1421 = vmatprep.mubr.f32.mxu0 0.0
        %1422 = vmatmul.mubr.f32.gmra.mrb[0].mxu0 %v1350
        %v1423 = vpop.f32.mrb[0].mxu0
        %v1424 = vadd.f32 0.0, %v1423
        %v1425 = vpop.f32.mrb[0].mxu0
        %1426 = vdwg.mxu0
        %1429 = vrot.lane.b32.xlu0 %v1344, 118
        %v1430 = vpop.permute.xlu0 %1429
        %1431 = vrot.lane.b32.xlu0 %v1345, 118
        %v1432 = vpop.permute.xlu0 %1431
        %v1433 = vsel %vm1226, %v1430, 0
        %v1435 = vsel %vm1226, %v1432, 0
        %1437 = vmatprep.subr.mxu0 0.0
        %1438 = vmatpush1.xpose.msra.mxu0 %v1433
        %1439 = vmatprep.subr.mxu0 0.0
        %1440 = vmatpush1.xpose.msra.mxu0 %v1435
        %1441 = vmatprep.subr.mxu0 0.0
        %1442 = vmatpush1.xpose.msra.mxu0 0.0
        %1443 = vmatprep.subr.mxu0 0.0
        %1444 = vmatpush1.xpose.msra.mxu0 0.0
        %1445 = vmatprep.subr.mxu0 0.0
        %1446 = vmatpush1.xpose.msra.mxu0 0.0
        %1447 = vmatprep.subr.mxu0 0.0
        %1448 = vmatpush1.xpose.msra.mxu0 0.0
        %1449 = vmatprep.subr.mxu0 0.0
        %1450 = vmatpush1.xpose.msra.mxu0 0.0
        %1451 = vmatprep.subr.mxu0 0.0
        %1452 = vmatpush1.xpose.msra.mxu0 0.0
        %1453 = vmatprep.subr.mxu0 0.0
        %1454 = vmatpush1.xpose.msra.mxu0 0.0
        %1455 = vmatprep.subr.mxu0 0.0
        %1456 = vmatpush1.xpose.msra.mxu0 0.0
        %1457 = vmatprep.subr.mxu0 0.0
        %1458 = vmatpush1.xpose.msra.mxu0 0.0
        %1459 = vmatprep.subr.mxu0 0.0
        %1460 = vmatpush1.xpose.msra.mxu0 0.0
        %1461 = vmatprep.subr.mxu0 0.0
        %1462 = vmatpush1.xpose.msra.mxu0 0.0
        %1463 = vmatprep.subr.mxu0 0.0
        %1464 = vmatpush1.xpose.msra.mxu0 0.0
        %1465 = vmatprep.subr.mxu0 0.0
        %1466 = vmatpush1.xpose.msra.mxu0 0.0
        %1467 = vmatprep.subr.mxu0 0.0
        %1468 = vmatpush1.xpose.msra.mxu0 0.0
        %1469 = vmatprep.subr.mxu0 0.0
        %1470 = vmatpush1.xpose.msra.mxu0 0.0
        %1471 = vmatprep.subr.mxu0 0.0
        %1472 = vmatpush1.xpose.msra.mxu0 0.0
        %1473 = vmatprep.subr.mxu0 0.0
        %1474 = vmatpush1.xpose.msra.mxu0 0.0
        %1475 = vmatprep.subr.mxu0 0.0
        %1476 = vmatpush1.xpose.msra.mxu0 0.0
        %1477 = vmatprep.subr.mxu0 0.0
        %1478 = vmatpush1.xpose.msra.mxu0 0.0
        %1479 = vmatprep.subr.mxu0 0.0
        %1480 = vmatpush1.xpose.msra.mxu0 0.0
        %1481 = vmatprep.subr.mxu0 0.0
        %1482 = vmatpush1.xpose.msra.mxu0 0.0
        %1483 = vmatprep.subr.mxu0 0.0
        %1484 = vmatpush1.xpose.msra.mxu0 0.0
        %1485 = vmatprep.subr.mxu0 0.0
        %1486 = vmatpush1.xpose.msra.mxu0 0.0
        %1487 = vmatprep.subr.mxu0 0.0
        %1488 = vmatpush1.xpose.msra.mxu0 0.0
        %1489 = vmatprep.subr.mxu0 0.0
        %1490 = vmatpush1.xpose.msra.mxu0 0.0
        %1491 = vmatprep.subr.mxu0 0.0
        %1492 = vmatpush1.xpose.msra.mxu0 0.0
        %1493 = vmatprep.subr.mxu0 0.0
        %1494 = vmatpush1.xpose.msra.mxu0 0.0
        %1495 = vmatprep.subr.mxu0 0.0
        %1496 = vmatpush1.xpose.msra.mxu0 0.0
        %1497 = vmatprep.subr.mxu0 0.0
        %1498 = vmatpush1.xpose.msra.mxu0 0.0
        %1499 = vmatprep.subr.mxu0 0.0
        %1500 = vmatpush1.xpose.msra.mxu0 0.0
        %1501 = vmatprep.mubr.f32.mxu0 0.0
        %1502 = vmatmul.mubr.f32.gmra.mrb[0].mxu0 %v1433
        %v1503 = vpop.f32.mrb[0].mxu0
        %v1504 = vadd.f32 0.0, %v1503
        %v1505 = vpop.f32.mrb[0].mxu0
        %1506 = vmatprep.mubr.f32.mxu0 0.0
        %1507 = vmatmul.mubr.f32.gmra.mrb[0].mxu0 %v1435
        %v1508 = vpop.f32.mrb[0].mxu0
        %v1509 = vadd.f32 0.0, %v1508
        %v1510 = vpop.f32.mrb[0].mxu0
        %1511 = vdwg.mxu0
        %v1512 = vsel %vm1226, %v1419, 0.0
        %v1513 = vsel %vm1230, %v1424, 0.0
        %v1514 = vadd.f32 %v1512, %v1513
        %1515 = vadd.xlane.f32.xlu0 %v1514
        %v1516 = vpop.xlane.xlu0 %1515
        %v1517 = vrot.slane %v1516, 4
        %v1518 = vadd.f32 %v1516, %v1517
        %v1519 = vrot.slane %v1518, 2
        %v1520 = vadd.f32 %v1518, %v1519
        %v1521 = vrot.slane %v1520, 1
        %v1522 = vadd.f32 %v1520, %v1521
        %s1523 = vtos %v1522
        %v1524 = vrcp.pop 10.0
        %s1525 = vtos %v1524
        %s1526 = smul.f32 %s1523, %s1525
        %v1527 = vstv %s1526
        %v1528 = vsub.f32 %v1419, %v1527
        %v1529 = vsub.f32 %v1424, %v1527
        %v1530 = vsel %vm1226, %v1504, 0.0
        %v1531 = vsel %vm1230, %v1509, 0.0
        %v1532 = vadd.f32 %v1530, %v1531
        %1533 = vadd.xlane.f32.xlu0 %v1532
        %v1534 = vpop.xlane.xlu0 %1533
        %v1535 = vrot.slane %v1534, 4
        %v1536 = vadd.f32 %v1534, %v1535
        %v1537 = vrot.slane %v1536, 2
        %v1538 = vadd.f32 %v1536, %v1537
        %v1539 = vrot.slane %v1538, 1
        %v1540 = vadd.f32 %v1538, %v1539
        %s1541 = vtos %v1540
        %v1542 = vrcp.pop 10.0
        %s1543 = vtos %v1542
        %s1544 = smul.f32 %s1541, %s1543
        %v1545 = vstv %s1544
        %v1546 = vsub.f32 %v1504, %v1545
        %v1547 = vsub.f32 %v1509, %v1545
        %v1548 = vmul.f32 %v1528, %v1546
        %v1549 = vmul.f32 %v1529, %v1547
        %v1550 = vsel %vm1226, %v1548, 0.0
        %v1551 = vsel %vm1230, %v1549, 0.0
        %v1552 = vadd.f32 %v1550, %v1551
        %1553 = vadd.xlane.f32.xlu0 %v1552
        %v1554 = vpop.xlane.xlu0 %1553
        %v1555 = vrot.slane %v1554, 4
        %v1556 = vadd.f32 %v1554, %v1555
        %v1557 = vrot.slane %v1556, 2
        %v1558 = vadd.f32 %v1556, %v1557
        %v1559 = vrot.slane %v1558, 1
        %v1560 = vadd.f32 %v1558, %v1559
        %s1561 = vtos %v1560
        %v1562 = vmul.f32 %v1528, %v1528
        %v1563 = vmul.f32 %v1529, %v1529
        %v1564 = vsel %vm1226, %v1562, 0.0
        %v1565 = vsel %vm1230, %v1563, 0.0
        %v1566 = vadd.f32 %v1564, %v1565
        %1567 = vadd.xlane.f32.xlu0 %v1566
        %v1568 = vpop.xlane.xlu0 %1567
        %v1569 = vrot.slane %v1568, 4
        %v1570 = vadd.f32 %v1568, %v1569
        %v1571 = vrot.slane %v1570, 2
        %v1572 = vadd.f32 %v1570, %v1571
        %v1573 = vrot.slane %v1572, 1
        %v1574 = vadd.f32 %v1572, %v1573
        %s1575 = vtos %v1574
        %v1576 = vmul.f32 %v1546, %v1546
        %v1577 = vmul.f32 %v1547, %v1547
        %v1578 = vsel %vm1226, %v1576, 0.0
        %v1579 = vsel %vm1230, %v1577, 0.0
        %v1580 = vadd.f32 %v1578, %v1579
        %1581 = vadd.xlane.f32.xlu0 %v1580
        %v1582 = vpop.xlane.xlu0 %1581
        %v1583 = vrot.slane %v1582, 4
        %v1584 = vadd.f32 %v1582, %v1583
        %v1585 = vrot.slane %v1584, 2
        %v1586 = vadd.f32 %v1584, %v1585
        %v1587 = vrot.slane %v1586, 1
        %v1588 = vadd.f32 %v1586, %v1587
        %s1589 = vtos %v1588
        %s1590 = smul.f32 %s1575, %s1589
        %v1591 = vstv %s1590
        %v1592 = vrsqrt.pop %v1591
        %v1593 = vmul.f32 %v1591, %v1592
        %vm1594 = vcmp.eq.f32.partialorder %v1591, inf
        %v1595 = vsel %vm1594, %v1591, %v1593
        %vm1596 = vcmp.eq.f32.partialorder %v1591, 0.0
        %v1597 = vand.u32 %v1591, 2147483648
        %v1598 = vsel %vm1596, %v1597, %v1595
        %s1599 = vtos %v1598
        %v1600 = vstv %s1599
        %v1601 = vrcp.pop %v1600
        %s1602 = vtos %v1601
        %s1603 = smul.f32 %s1561, %s1602
        %v1604 = vstv %s1603
        %1605 = vst [vmem:[%s334] sm:$0xff] %v1604
        %p1606 = scmp.eq.s32.totalorder %s29, 0
        // Predicated region
        $region57: #{tpu_custom_call.1} parent=39 // pred_check
          %p1607 = pneg %p1606
        $region58: #{tpu_custom_call.1} parent=39 // pred_check_branch
          %1609 = sbr.rel (%p1607) target = $region60
        $region59: #{tpu_custom_call.1} parent=39 // pred_region
          %v1610 = vld [vmem:[%s292] sm:$0xff]
          %v1611 = vld [vmem:[%s292 + $0x8] sm:$0xff]
          %v1612 = vld [vmem:[%s292 + $0x10] sm:$0xff]
          %v1613 = vld [vmem:[%s292 + $0x18] sm:$0xff]
          %v1614 = vld [vmem:[%s292 + $0x20] sm:$0xff]
          %v1615 = vld [vmem:[%s292 + $0x28] sm:$0xff]
          %v1616 = vld [vmem:[%s292 + $0x30] sm:$0xff]
          %v1617 = vld [vmem:[%s292 + $0x38] sm:$0xff]
          %v1618 = vld [vmem:[%s292 + $0x40] sm:$0xff]
          %v1619 = vld [vmem:[%s292 + $0x48] sm:$0xff]
          %v1620 = vld [vmem:[%s292 + $0x50] sm:$0xff]
          %v1621 = vld [vmem:[%s292 + $0x58] sm:$0xff]
          %v1622 = vld [vmem:[%s292 + $0x60] sm:$0x11]
          %v1623 = vld [vmem:[%s292 + $0x68] sm:$0x11]
          %v1624 = vld [vmem:[%s292 + $0x70] sm:$0x11]
          %v1625 = vld [vmem:[%s292 + $0x78] sm:$0x11]
          %v1626 = vld [vmem:[%s292 + $0x80] sm:$0x11]
          %v1627 = vld [vmem:[%s292 + $0x88] sm:$0x11]
          %v1628 = vld [vmem:[%s292 + $0x90] sm:$0x11]
          %v1629 = vld [vmem:[%s292 + $0x98] sm:$0x11]
          %v1630 = vld [vmem:[%s292 + $0xa0] sm:$0x11]
          %v1631 = vld [vmem:[%s292 + $0xa8] sm:$0x11]
          %v1632 = vld [vmem:[%s292 + $0xb0] sm:$0x11]
          %v1633 = vld [vmem:[%s292 + $0xb8] sm:$0x11]
          %v1634 = vld [vmem:[#allocation8] sm:$0xff]
          %v1635 = vld [vmem:[#allocation8 + $0x8] sm:$0xff]
          %v1636 = vld [vmem:[#allocation8 + $0x10] sm:$0xff]
          %v1637 = vld [vmem:[#allocation8 + $0x18] sm:$0xff]
          %v1638 = vld [vmem:[#allocation8 + $0x20] sm:$0xff]
          %v1639 = vld [vmem:[#allocation8 + $0x28] sm:$0xff]
          %v1640 = vld [vmem:[#allocation8 + $0x30] sm:$0xff]
          %v1641 = vld [vmem:[#allocation8 + $0x38] sm:$0xff]
          %v1642 = vld [vmem:[#allocation8 + $0x40] sm:$0xff]
          %v1643 = vld [vmem:[#allocation8 + $0x48] sm:$0xff]
          %v1644 = vld [vmem:[#allocation8 + $0x50] sm:$0xff]
          %v1645 = vld [vmem:[#allocation8 + $0x58] sm:$0xff]
          %v1646 = vld [vmem:[#allocation8 + $0x60] sm:$0xff]
          %v1647 = vld [vmem:[#allocation8 + $0x68] sm:$0xff]
          %v1648 = vld [vmem:[#allocation8 + $0x70] sm:$0xff]
          %v1649 = vld [vmem:[#allocation8 + $0x78] sm:$0xff]
          %v1650 = vld [vmem:[#allocation8 + $0x80] sm:$0xff]
          %v1651 = vld [vmem:[#allocation8 + $0x88] sm:$0xff]
          %v1652 = vld [vmem:[#allocation8 + $0x90] sm:$0xff]
          %v1653 = vld [vmem:[#allocation8 + $0x98] sm:$0xff]
          %v1654 = vld [vmem:[#allocation8 + $0xa0] sm:$0xff]
          %v1655 = vld [vmem:[#allocation8 + $0xa8] sm:$0xff]
          %v1656 = vld [vmem:[#allocation8 + $0xb0] sm:$0xff]
          %v1657 = vld [vmem:[#allocation8 + $0xb8] sm:$0xff]
          %v1658 = vld [vmem:[#allocation8 + $0xc0] sm:$0x33]
          %v1659 = vld [vmem:[#allocation8 + $0xc8] sm:$0x33]
          %v1660 = vld [vmem:[#allocation8 + $0xd0] sm:$0x33]
          %v1661 = vld [vmem:[#allocation8 + $0xd8] sm:$0x33]
          %v1662 = vld [vmem:[#allocation8 + $0xe0] sm:$0x33]
          %v1663 = vld [vmem:[#allocation8 + $0xe8] sm:$0x33]
          %v1664 = vld [vmem:[#allocation8 + $0xf0] sm:$0x33]
          %v1665 = vld [vmem:[#allocation8 + $0xf8] sm:$0x33]
          %v1666 = vld [vmem:[#allocation8 + $0x100] sm:$0x33]
          %v1667 = vld [vmem:[#allocation8 + $0x108] sm:$0x33]
          %v1668 = vld [vmem:[#allocation8 + $0x110] sm:$0x33]
          %v1669 = vld [vmem:[#allocation8 + $0x118] sm:$0x33]
          %v1706 = vunpack.c.l.b16 %v1634
          %v1707 = vunpack.c.h.b16 %v1634
          %v1708 = vunpack.c.l.b16 %v1635
          %v1709 = vunpack.c.h.b16 %v1635
          %v1710 = vunpack.c.l.b16 %v1636
          %v1711 = vunpack.c.h.b16 %v1636
          %v1712 = vunpack.c.l.b16 %v1637
          %v1713 = vunpack.c.h.b16 %v1637
          %v1714 = vunpack.c.l.b16 %v1638
          %v1715 = vunpack.c.h.b16 %v1638
          %v1716 = vunpack.c.l.b16 %v1639
          %v1717 = vunpack.c.h.b16 %v1639
          %v1718 = vunpack.c.l.b16 %v1640
          %v1719 = vunpack.c.h.b16 %v1640
          %v1720 = vunpack.c.l.b16 %v1641
          %v1721 = vunpack.c.h.b16 %v1641
          %v1722 = vunpack.c.l.b16 %v1642
          %v1723 = vunpack.c.h.b16 %v1642
          %v1724 = vunpack.c.l.b16 %v1643
          %v1725 = vunpack.c.h.b16 %v1643
          %v1726 = vunpack.c.l.b16 %v1644
          %v1727 = vunpack.c.h.b16 %v1644
          %v1728 = vunpack.c.l.b16 %v1645
          %v1729 = vunpack.c.h.b16 %v1645
          %v1730 = vunpack.c.l.b16 %v1646
          %v1731 = vunpack.c.h.b16 %v1646
          %v1732 = vunpack.c.l.b16 %v1647
          %v1733 = vunpack.c.h.b16 %v1647
          %v1734 = vunpack.c.l.b16 %v1648
          %v1735 = vunpack.c.h.b16 %v1648
          %v1736 = vunpack.c.l.b16 %v1649
          %v1737 = vunpack.c.h.b16 %v1649
          %v1738 = vunpack.c.l.b16 %v1650
          %v1739 = vunpack.c.h.b16 %v1650
          %v1740 = vunpack.c.l.b16 %v1651
          %v1741 = vunpack.c.h.b16 %v1651
          %v1742 = vunpack.c.l.b16 %v1652
          %v1743 = vunpack.c.h.b16 %v1652
          %v1744 = vunpack.c.l.b16 %v1653
          %v1745 = vunpack.c.h.b16 %v1653
          %v1746 = vunpack.c.l.b16 %v1654
          %v1747 = vunpack.c.h.b16 %v1654
          %v1748 = vunpack.c.l.b16 %v1655
          %v1749 = vunpack.c.h.b16 %v1655
          %v1750 = vunpack.c.l.b16 %v1656
          %v1751 = vunpack.c.h.b16 %v1656
          %v1752 = vunpack.c.l.b16 %v1657
          %v1753 = vunpack.c.h.b16 %v1657
          %v1754 = vunpack.c.l.b16 %v1658
          %v1755 = vunpack.c.h.b16 %v1658
          %v1756 = vunpack.c.l.b16 %v1659
          %v1757 = vunpack.c.h.b16 %v1659
          %v1758 = vunpack.c.l.b16 %v1660
          %v1759 = vunpack.c.h.b16 %v1660
          %v1760 = vunpack.c.l.b16 %v1661
          %v1761 = vunpack.c.h.b16 %v1661
          %v1762 = vunpack.c.l.b16 %v1662
          %v1763 = vunpack.c.h.b16 %v1662
          %v1764 = vunpack.c.l.b16 %v1663
          %v1765 = vunpack.c.h.b16 %v1663
          %v1766 = vunpack.c.l.b16 %v1664
          %v1767 = vunpack.c.h.b16 %v1664
          %v1768 = vunpack.c.l.b16 %v1665
          %v1769 = vunpack.c.h.b16 %v1665
          %v1770 = vunpack.c.l.b16 %v1666
          %v1771 = vunpack.c.h.b16 %v1666
          %v1772 = vunpack.c.l.b16 %v1667
          %v1773 = vunpack.c.h.b16 %v1667
          %v1774 = vunpack.c.l.b16 %v1668
          %v1775 = vunpack.c.h.b16 %v1668
          %v1776 = vunpack.c.l.b16 %v1669
          %v1777 = vunpack.c.h.b16 %v1669
          %v1778 = vpack.c.b16 %v1730, %v1706
          %v1779 = vpack.c.b16 %v1731, %v1707
          %v1780 = vpack.c.b16 %v1732, %v1708
          %v1781 = vpack.c.b16 %v1733, %v1709
          %v1782 = vpack.c.b16 %v1734, %v1710
          %v1783 = vpack.c.b16 %v1735, %v1711
          %v1784 = vpack.c.b16 %v1736, %v1712
          %v1785 = vpack.c.b16 %v1737, %v1713
          %v1786 = vpack.c.b16 %v1738, %v1714
          %v1787 = vpack.c.b16 %v1739, %v1715
          %v1788 = vpack.c.b16 %v1740, %v1716
          %v1789 = vpack.c.b16 %v1741, %v1717
          %v1790 = vpack.c.b16 %v1742, %v1718
          %v1791 = vpack.c.b16 %v1743, %v1719
          %v1792 = vpack.c.b16 %v1744, %v1720
          %v1793 = vpack.c.b16 %v1745, %v1721
          %v1794 = vpack.c.b16 %v1746, %v1722
          %v1795 = vpack.c.b16 %v1747, %v1723
          %v1796 = vpack.c.b16 %v1748, %v1724
          %v1797 = vpack.c.b16 %v1749, %v1725
          %v1798 = vpack.c.b16 %v1750, %v1726
          %v1799 = vpack.c.b16 %v1751, %v1727
          %v1800 = vpack.c.b16 %v1752, %v1728
          %v1801 = vpack.c.b16 %v1753, %v1729
          %v1802 = vpack.c.b16 %v1754, %v1754
          %v1803 = vpack.c.b16 %v1755, %v1755
          %v1804 = vpack.c.b16 %v1756, %v1756
          %v1805 = vpack.c.b16 %v1757, %v1757
          %v1806 = vpack.c.b16 %v1758, %v1758
          %v1807 = vpack.c.b16 %v1759, %v1759
          %v1808 = vpack.c.b16 %v1760, %v1760
          %v1809 = vpack.c.b16 %v1761, %v1761
          %v1810 = vpack.c.b16 %v1762, %v1762
          %v1811 = vpack.c.b16 %v1763, %v1763
          %v1812 = vpack.c.b16 %v1764, %v1764
          %v1813 = vpack.c.b16 %v1765, %v1765
          %v1814 = vpack.c.b16 %v1766, %v1766
          %v1815 = vpack.c.b16 %v1767, %v1767
          %v1816 = vpack.c.b16 %v1768, %v1768
          %v1817 = vpack.c.b16 %v1769, %v1769
          %v1818 = vpack.c.b16 %v1770, %v1770
          %v1819 = vpack.c.b16 %v1771, %v1771
          %v1820 = vpack.c.b16 %v1772, %v1772
          %v1821 = vpack.c.b16 %v1773, %v1773
          %v1822 = vpack.c.b16 %v1774, %v1774
          %v1823 = vpack.c.b16 %v1775, %v1775
          %v1824 = vpack.c.b16 %v1776, %v1776
          %v1825 = vpack.c.b16 %v1777, %v1777
          %v1898 = vunpack.c.l.b16 %v1610
          %v1899 = vunpack.c.h.b16 %v1610
          %v1900 = vunpack.c.l.b16 %v1611
          %v1901 = vunpack.c.h.b16 %v1611
          %v1902 = vunpack.c.l.b16 %v1612
          %v1903 = vunpack.c.h.b16 %v1612
          %v1904 = vunpack.c.l.b16 %v1613
          %v1905 = vunpack.c.h.b16 %v1613
          %v1906 = vunpack.c.l.b16 %v1614
          %v1907 = vunpack.c.h.b16 %v1614
          %v1908 = vunpack.c.l.b16 %v1615
          %v1909 = vunpack.c.h.b16 %v1615
          %v1910 = vunpack.c.l.b16 %v1616
          %v1911 = vunpack.c.h.b16 %v1616
          %v1912 = vunpack.c.l.b16 %v1617
          %v1913 = vunpack.c.h.b16 %v1617
          %v1914 = vunpack.c.l.b16 %v1618
          %v1915 = vunpack.c.h.b16 %v1618
          %v1916 = vunpack.c.l.b16 %v1619
          %v1917 = vunpack.c.h.b16 %v1619
          %v1918 = vunpack.c.l.b16 %v1620
          %v1919 = vunpack.c.h.b16 %v1620
          %v1920 = vunpack.c.l.b16 %v1621
          %v1921 = vunpack.c.h.b16 %v1621
          %v1922 = vunpack.c.l.b16 %v1622
          %v1923 = vunpack.c.h.b16 %v1622
          %v1924 = vunpack.c.l.b16 %v1623
          %v1925 = vunpack.c.h.b16 %v1623
          %v1926 = vunpack.c.l.b16 %v1624
          %v1927 = vunpack.c.h.b16 %v1624
          %v1928 = vunpack.c.l.b16 %v1625
          %v1929 = vunpack.c.h.b16 %v1625
          %v1930 = vunpack.c.l.b16 %v1626
          %v1931 = vunpack.c.h.b16 %v1626
          %v1932 = vunpack.c.l.b16 %v1627
          %v1933 = vunpack.c.h.b16 %v1627
          %v1934 = vunpack.c.l.b16 %v1628
          %v1935 = vunpack.c.h.b16 %v1628
          %v1936 = vunpack.c.l.b16 %v1629
          %v1937 = vunpack.c.h.b16 %v1629
          %v1938 = vunpack.c.l.b16 %v1630
          %v1939 = vunpack.c.h.b16 %v1630
          %v1940 = vunpack.c.l.b16 %v1631
          %v1941 = vunpack.c.h.b16 %v1631
          %v1942 = vunpack.c.l.b16 %v1632
          %v1943 = vunpack.c.h.b16 %v1632
          %v1944 = vunpack.c.l.b16 %v1633
          %v1945 = vunpack.c.h.b16 %v1633
          %v1946 = vpack.c.b16 %v1922, %v1898
          %v1947 = vpack.c.b16 %v1923, %v1899
          %v1948 = vpack.c.b16 %v1924, %v1900
          %v1949 = vpack.c.b16 %v1925, %v1901
          %v1950 = vpack.c.b16 %v1926, %v1902
          %v1951 = vpack.c.b16 %v1927, %v1903
          %v1952 = vpack.c.b16 %v1928, %v1904
          %v1953 = vpack.c.b16 %v1929, %v1905
          %v1954 = vpack.c.b16 %v1930, %v1906
          %v1955 = vpack.c.b16 %v1931, %v1907
          %v1956 = vpack.c.b16 %v1932, %v1908
          %v1957 = vpack.c.b16 %v1933, %v1909
          %v1958 = vpack.c.b16 %v1934, %v1910
          %v1959 = vpack.c.b16 %v1935, %v1911
          %v1960 = vpack.c.b16 %v1936, %v1912
          %v1961 = vpack.c.b16 %v1937, %v1913
          %v1962 = vpack.c.b16 %v1938, %v1914
          %v1963 = vpack.c.b16 %v1939, %v1915
          %v1964 = vpack.c.b16 %v1940, %v1916
          %v1965 = vpack.c.b16 %v1941, %v1917
          %v1966 = vpack.c.b16 %v1942, %v1918
          %v1967 = vpack.c.b16 %v1943, %v1919
          %v1968 = vpack.c.b16 %v1944, %v1920
          %v1969 = vpack.c.b16 %v1945, %v1921
          %1994 = vmatprep.subr.bf16.mxu0 %v1947
          %1995 = vmatpush1.bf16.xpose.msra.mxu0 %v1946
          %1996 = vmatprep.subr.bf16.mxu0 0
          %1997 = vmatpush1.bf16.xpose.msra.mxu0 0
          %1998 = vmatprep.subr.bf16.mxu0 0
          %1999 = vmatpush1.bf16.xpose.msra.mxu0 0
          %2000 = vmatprep.subr.bf16.mxu0 0
          %2001 = vmatpush1.bf16.xpose.msra.mxu0 0
          %2002 = vmatprep.subr.bf16.mxu0 0
          %2003 = vmatpush1.bf16.xpose.msra.mxu0 0
          %2004 = vmatprep.subr.bf16.mxu0 0
          %2005 = vmatpush1.bf16.xpose.msra.mxu0 0
          %2006 = vmatprep.subr.bf16.mxu0 0
          %2007 = vmatpush1.bf16.xpose.msra.mxu0 0
          %2008 = vmatprep.subr.bf16.mxu0 0
          %2009 = vmatpush1.bf16.xpose.msra.mxu0 0
          %2010 = vmatprep.subr.bf16.mxu0 0
          %2011 = vmatpush1.bf16.xpose.msra.mxu0 0
          %2012 = vmatprep.subr.bf16.mxu0 0
          %2013 = vmatpush1.bf16.xpose.msra.mxu0 0
          %2014 = vmatprep.subr.bf16.mxu0 0
          %2015 = vmatpush1.bf16.xpose.msra.mxu0 0
          %2016 = vmatprep.subr.bf16.mxu0 0
          %2017 = vmatpush1.bf16.xpose.msra.mxu0 0
          %2018 = vmatprep.subr.bf16.mxu0 0
          %2019 = vmatpush1.bf16.xpose.msra.mxu0 0
          %2020 = vmatprep.subr.bf16.mxu0 0
          %2021 = vmatpush1.bf16.xpose.msra.mxu0 0
          %2022 = vmatprep.subr.bf16.mxu0 0
          %2023 = vmatpush1.bf16.xpose.msra.mxu0 0
          %2024 = vmatprep.subr.bf16.mxu0 0
          %2025 = vmatpush1.bf16.xpose.msra.mxu0 0
          %2026 = vmatprep.mubr.bf16.mxu0 %v1779
          %2027 = vmatmul.mubr.bf16.gmra.mrb[0].mxu0 %v1778
          %v2028 = vpop.f32.mrb[0].mxu0
          %v2029 = vadd.f32 %v408, %v2028
          %v2030 = vpop.f32.mrb[0].mxu0
          %v2031 = vpop.f32.mrb[0].mxu0
          %v2032 = vadd.f32 %v408, %v2031
          %v2033 = vpop.f32.mrb[0].mxu0
          %2034 = vmatprep.mubr.bf16.mxu0 %v1803
          %2035 = vmatmul.mubr.bf16.gmra.mrb[0].mxu0 %v1802
          %v2036 = vpop.f32.mrb[0].mxu0
          %v2037 = vadd.f32 %v408, %v2036
          %v2038 = vpop.f32.mrb[0].mxu0
          %v2039 = vpop.f32.mrb[0].mxu0
          %v2040 = vpop.f32.mrb[0].mxu0
          %2041 = vdwg.mxu0
          %2042 = vmatprep.subr.bf16.mxu0 %v1949
          %2043 = vmatpush1.bf16.xpose.msra.mxu0 %v1948
          %2044 = vmatprep.subr.bf16.mxu0 0
          %2045 = vmatpush1.bf16.xpose.msra.mxu0 0
          %2046 = vmatprep.subr.bf16.mxu0 0
          %2047 = vmatpush1.bf16.xpose.msra.mxu0 0
          %2048 = vmatprep.subr.bf16.mxu0 0
          %2049 = vmatpush1.bf16.xpose.msra.mxu0 0
          %2050 = vmatprep.subr.bf16.mxu0 0
          %2051 = vmatpush1.bf16.xpose.msra.mxu0 0
          %2052 = vmatprep.subr.bf16.mxu0 0
          %2053 = vmatpush1.bf16.xpose.msra.mxu0 0
          %2054 = vmatprep.subr.bf16.mxu0 0
          %2055 = vmatpush1.bf16.xpose.msra.mxu0 0
          %2056 = vmatprep.subr.bf16.mxu0 0
          %2057 = vmatpush1.bf16.xpose.msra.mxu0 0
          %2058 = vmatprep.subr.bf16.mxu0 0
          %2059 = vmatpush1.bf16.xpose.msra.mxu0 0
          %2060 = vmatprep.subr.bf16.mxu0 0
          %2061 = vmatpush1.bf16.xpose.msra.mxu0 0
          %2062 = vmatprep.subr.bf16.mxu0 0
          %2063 = vmatpush1.bf16.xpose.msra.mxu0 0
          %2064 = vmatprep.subr.bf16.mxu0 0
          %2065 = vmatpush1.bf16.xpose.msra.mxu0 0
          %2066 = vmatprep.subr.bf16.mxu0 0
          %2067 = vmatpush1.bf16.xpose.msra.mxu0 0
          %2068 = vmatprep.subr.bf16.mxu0 0
          %2069 = vmatpush1.bf16.xpose.msra.mxu0 0
          %2070 = vmatprep.subr.bf16.mxu0 0
          %2071 = vmatpush1.bf16.xpose.msra.mxu0 0
          %2072 = vmatprep.subr.bf16.mxu0 0
          %2073 = vmatpush1.bf16.xpose.msra.mxu0 0
          %2074 = vmatprep.mubr.bf16.mxu0 %v1781
          %2075 = vmatmul.mubr.bf16.gmra.mrb[0].mxu0 %v1780
          %v2076 = vpop.f32.mrb[0].mxu0
          %v2077 = vadd.f32 %v2029, %v2076
          %v2078 = vpop.f32.mrb[0].mxu0
          %v2079 = vpop.f32.mrb[0].mxu0
          %v2080 = vadd.f32 %v2032, %v2079
          %v2081 = vpop.f32.mrb[0].mxu0
          %2082 = vmatprep.mubr.bf16.mxu0 %v1805
          %2083 = vmatmul.mubr.bf16.gmra.mrb[0].mxu0 %v1804
          %v2084 = vpop.f32.mrb[0].mxu0
          %v2085 = vadd.f32 %v2037, %v2084
          %v2086 = vpop.f32.mrb[0].mxu0
          %v2087 = vpop.f32.mrb[0].mxu0
          %v2088 = vpop.f32.mrb[0].mxu0
          %2089 = vdwg.mxu0
          %2090 = vmatprep.subr.bf16.mxu0 %v1951
          %2091 = vmatpush1.bf16.xpose.msra.mxu0 %v1950
          %2092 = vmatprep.subr.bf16.mxu0 0
          %2093 = vmatpush1.bf16.xpose.msra.mxu0 0
          %2094 = vmatprep.subr.bf16.mxu0 0
          %2095 = vmatpush1.bf16.xpose.msra.mxu0 0
          %2096 = vmatprep.subr.bf16.mxu0 0
          %2097 = vmatpush1.bf16.xpose.msra.mxu0 0
          %2098 = vmatprep.subr.bf16.mxu0 0
          %2099 = vmatpush1.bf16.xpose.msra.mxu0 0
          %2100 = vmatprep.subr.bf16.mxu0 0
          %2101 = vmatpush1.bf16.xpose.msra.mxu0 0
          %2102 = vmatprep.subr.bf16.mxu0 0
          %2103 = vmatpush1.bf16.xpose.msra.mxu0 0
          %2104 = vmatprep.subr.bf16.mxu0 0
          %2105 = vmatpush1.bf16.xpose.msra.mxu0 0
          %2106 = vmatprep.subr.bf16.mxu0 0
          %2107 = vmatpush1.bf16.xpose.msra.mxu0 0
          %2108 = vmatprep.subr.bf16.mxu0 0
          %2109 = vmatpush1.bf16.xpose.msra.mxu0 0
          %2110 = vmatprep.subr.bf16.mxu0 0
          %2111 = vmatpush1.bf16.xpose.msra.mxu0 0
          %2112 = vmatprep.subr.bf16.mxu0 0
          %2113 = vmatpush1.bf16.xpose.msra.mxu0 0
          %2114 = vmatprep.subr.bf16.mxu0 0
          %2115 = vmatpush1.bf16.xpose.msra.mxu0 0
          %2116 = vmatprep.subr.bf16.mxu0 0
          %2117 = vmatpush1.bf16.xpose.msra.mxu0 0
          %2118 = vmatprep.subr.bf16.mxu0 0
          %2119 = vmatpush1.bf16.xpose.msra.mxu0 0
          %2120 = vmatprep.subr.bf16.mxu0 0
          %2121 = vmatpush1.bf16.xpose.msra.mxu0 0
          %2122 = vmatprep.mubr.bf16.mxu0 %v1783
          %2123 = vmatmul.mubr.bf16.gmra.mrb[0].mxu0 %v1782
          %v2124 = vpop.f32.mrb[0].mxu0
          %v2125 = vadd.f32 %v2077, %v2124
          %v2126 = vpop.f32.mrb[0].mxu0
          %v2127 = vpop.f32.mrb[0].mxu0
          %v2128 = vadd.f32 %v2080, %v2127
          %v2129 = vpop.f32.mrb[0].mxu0
          %2130 = vmatprep.mubr.bf16.mxu0 %v1807
          %2131 = vmatmul.mubr.bf16.gmra.mrb[0].mxu0 %v1806
          %v2132 = vpop.f32.mrb[0].mxu0
          %v2133 = vadd.f32 %v2085, %v2132
          %v2134 = vpop.f32.mrb[0].mxu0
          %v2135 = vpop.f32.mrb[0].mxu0
          %v2136 = vpop.f32.mrb[0].mxu0
          %2137 = vdwg.mxu0
          %2138 = vmatprep.subr.bf16.mxu0 %v1953
          %2139 = vmatpush1.bf16.xpose.msra.mxu0 %v1952
          %2140 = vmatprep.subr.bf16.mxu0 0
          %2141 = vmatpush1.bf16.xpose.msra.mxu0 0
          %2142 = vmatprep.subr.bf16.mxu0 0
          %2143 = vmatpush1.bf16.xpose.msra.mxu0 0
          %2144 = vmatprep.subr.bf16.mxu0 0
          %2145 = vmatpush1.bf16.xpose.msra.mxu0 0
          %2146 = vmatprep.subr.bf16.mxu0 0
          %2147 = vmatpush1.bf16.xpose.msra.mxu0 0
          %2148 = vmatprep.subr.bf16.mxu0 0
          %2149 = vmatpush1.bf16.xpose.msra.mxu0 0
          %2150 = vmatprep.subr.bf16.mxu0 0
          %2151 = vmatpush1.bf16.xpose.msra.mxu0 0
          %2152 = vmatprep.subr.bf16.mxu0 0
          %2153 = vmatpush1.bf16.xpose.msra.mxu0 0
          %2154 = vmatprep.subr.bf16.mxu0 0
          %2155 = vmatpush1.bf16.xpose.msra.mxu0 0
          %2156 = vmatprep.subr.bf16.mxu0 0
          %2157 = vmatpush1.bf16.xpose.msra.mxu0 0
          %2158 = vmatprep.subr.bf16.mxu0 0
          %2159 = vmatpush1.bf16.xpose.msra.mxu0 0
          %2160 = vmatprep.subr.bf16.mxu0 0
          %2161 = vmatpush1.bf16.xpose.msra.mxu0 0
          %2162 = vmatprep.subr.bf16.mxu0 0
          %2163 = vmatpush1.bf16.xpose.msra.mxu0 0
          %2164 = vmatprep.subr.bf16.mxu0 0
          %2165 = vmatpush1.bf16.xpose.msra.mxu0 0
          %2166 = vmatprep.subr.bf16.mxu0 0
          %2167 = vmatpush1.bf16.xpose.msra.mxu0 0
          %2168 = vmatprep.subr.bf16.mxu0 0
          %2169 = vmatpush1.bf16.xpose.msra.mxu0 0
          %2170 = vmatprep.mubr.bf16.mxu0 %v1785
          %2171 = vmatmul.mubr.bf16.gmra.mrb[0].mxu0 %v1784
          %v2172 = vpop.f32.mrb[0].mxu0
          %v2173 = vadd.f32 %v2125, %v2172
          %v2174 = vpop.f32.mrb[0].mxu0
          %v2175 = vpop.f32.mrb[0].mxu0
          %v2176 = vadd.f32 %v2128, %v2175
          %v2177 = vpop.f32.mrb[0].mxu0
          %2178 = vmatprep.mubr.bf16.mxu0 %v1809
          %2179 = vmatmul.mubr.bf16.gmra.mrb[0].mxu0 %v1808
          %v2180 = vpop.f32.mrb[0].mxu0
          %v2181 = vadd.f32 %v2133, %v2180
          %v2182 = vpop.f32.mrb[0].mxu0
          %v2183 = vpop.f32.mrb[0].mxu0
          %v2184 = vpop.f32.mrb[0].mxu0
          %2185 = vdwg.mxu0
          %2186 = vmatprep.subr.bf16.mxu0 %v1955
          %2187 = vmatpush1.bf16.xpose.msra.mxu0 %v1954
          %2188 = vmatprep.subr.bf16.mxu0 0
          %2189 = vmatpush1.bf16.xpose.msra.mxu0 0
          %2190 = vmatprep.subr.bf16.mxu0 0
          %2191 = vmatpush1.bf16.xpose.msra.mxu0 0
          %2192 = vmatprep.subr.bf16.mxu0 0
          %2193 = vmatpush1.bf16.xpose.msra.mxu0 0
          %2194 = vmatprep.subr.bf16.mxu0 0
          %2195 = vmatpush1.bf16.xpose.msra.mxu0 0
          %2196 = vmatprep.subr.bf16.mxu0 0
          %2197 = vmatpush1.bf16.xpose.msra.mxu0 0
          %2198 = vmatprep.subr.bf16.mxu0 0
          %2199 = vmatpush1.bf16.xpose.msra.mxu0 0
          %2200 = vmatprep.subr.bf16.mxu0 0
          %2201 = vmatpush1.bf16.xpose.msra.mxu0 0
          %2202 = vmatprep.subr.bf16.mxu0 0
          %2203 = vmatpush1.bf16.xpose.msra.mxu0 0
          %2204 = vmatprep.subr.bf16.mxu0 0
          %2205 = vmatpush1.bf16.xpose.msra.mxu0 0
          %2206 = vmatprep.subr.bf16.mxu0 0
          %2207 = vmatpush1.bf16.xpose.msra.mxu0 0
          %2208 = vmatprep.subr.bf16.mxu0 0
          %2209 = vmatpush1.bf16.xpose.msra.mxu0 0
          %2210 = vmatprep.subr.bf16.mxu0 0
          %2211 = vmatpush1.bf16.xpose.msra.mxu0 0
          %2212 = vmatprep.subr.bf16.mxu0 0
          %2213 = vmatpush1.bf16.xpose.msra.mxu0 0
          %2214 = vmatprep.subr.bf16.mxu0 0
          %2215 = vmatpush1.bf16.xpose.msra.mxu0 0
          %2216 = vmatprep.subr.bf16.mxu0 0
          %2217 = vmatpush1.bf16.xpose.msra.mxu0 0
          %2218 = vmatprep.mubr.bf16.mxu0 %v1787
          %2219 = vmatmul.mubr.bf16.gmra.mrb[0].mxu0 %v1786
          %v2220 = vpop.f32.mrb[0].mxu0
          %v2221 = vadd.f32 %v2173, %v2220
          %v2222 = vpop.f32.mrb[0].mxu0
          %v2223 = vpop.f32.mrb[0].mxu0
          %v2224 = vadd.f32 %v2176, %v2223
          %v2225 = vpop.f32.mrb[0].mxu0
          %2226 = vmatprep.mubr.bf16.mxu0 %v1811
          %2227 = vmatmul.mubr.bf16.gmra.mrb[0].mxu0 %v1810
          %v2228 = vpop.f32.mrb[0].mxu0
          %v2229 = vadd.f32 %v2181, %v2228
          %v2230 = vpop.f32.mrb[0].mxu0
          %v2231 = vpop.f32.mrb[0].mxu0
          %v2232 = vpop.f32.mrb[0].mxu0
          %2233 = vdwg.mxu0
          %2234 = vmatprep.subr.bf16.mxu0 %v1957
          %2235 = vmatpush1.bf16.xpose.msra.mxu0 %v1956
          %2236 = vmatprep.subr.bf16.mxu0 0
          %2237 = vmatpush1.bf16.xpose.msra.mxu0 0
          %2238 = vmatprep.subr.bf16.mxu0 0
          %2239 = vmatpush1.bf16.xpose.msra.mxu0 0
          %2240 = vmatprep.subr.bf16.mxu0 0
          %2241 = vmatpush1.bf16.xpose.msra.mxu0 0
          %2242 = vmatprep.subr.bf16.mxu0 0
          %2243 = vmatpush1.bf16.xpose.msra.mxu0 0
          %2244 = vmatprep.subr.bf16.mxu0 0
          %2245 = vmatpush1.bf16.xpose.msra.mxu0 0
          %2246 = vmatprep.subr.bf16.mxu0 0
          %2247 = vmatpush1.bf16.xpose.msra.mxu0 0
          %2248 = vmatprep.subr.bf16.mxu0 0
          %2249 = vmatpush1.bf16.xpose.msra.mxu0 0
          %2250 = vmatprep.subr.bf16.mxu0 0
          %2251 = vmatpush1.bf16.xpose.msra.mxu0 0
          %2252 = vmatprep.subr.bf16.mxu0 0
          %2253 = vmatpush1.bf16.xpose.msra.mxu0 0
          %2254 = vmatprep.subr.bf16.mxu0 0
          %2255 = vmatpush1.bf16.xpose.msra.mxu0 0
          %2256 = vmatprep.subr.bf16.mxu0 0
          %2257 = vmatpush1.bf16.xpose.msra.mxu0 0
          %2258 = vmatprep.subr.bf16.mxu0 0
          %2259 = vmatpush1.bf16.xpose.msra.mxu0 0
          %2260 = vmatprep.subr.bf16.mxu0 0
          %2261 = vmatpush1.bf16.xpose.msra.mxu0 0
          %2262 = vmatprep.subr.bf16.mxu0 0
          %2263 = vmatpush1.bf16.xpose.msra.mxu0 0
          %2264 = vmatprep.subr.bf16.mxu0 0
          %2265 = vmatpush1.bf16.xpose.msra.mxu0 0
          %2266 = vmatprep.mubr.bf16.mxu0 %v1789
          %2267 = vmatmul.mubr.bf16.gmra.mrb[0].mxu0 %v1788
          %v2268 = vpop.f32.mrb[0].mxu0
          %v2269 = vadd.f32 %v2221, %v2268
          %v2270 = vpop.f32.mrb[0].mxu0
          %v2271 = vpop.f32.mrb[0].mxu0
          %v2272 = vadd.f32 %v2224, %v2271
          %v2273 = vpop.f32.mrb[0].mxu0
          %2274 = vmatprep.mubr.bf16.mxu0 %v1813
          %2275 = vmatmul.mubr.bf16.gmra.mrb[0].mxu0 %v1812
          %v2276 = vpop.f32.mrb[0].mxu0
          %v2277 = vadd.f32 %v2229, %v2276
          %v2278 = vpop.f32.mrb[0].mxu0
          %v2279 = vpop.f32.mrb[0].mxu0
          %v2280 = vpop.f32.mrb[0].mxu0
          %2281 = vdwg.mxu0
          %2282 = vmatprep.subr.bf16.mxu0 %v1959
          %2283 = vmatpush1.bf16.xpose.msra.mxu0 %v1958
          %2284 = vmatprep.subr.bf16.mxu0 0
          %2285 = vmatpush1.bf16.xpose.msra.mxu0 0
          %2286 = vmatprep.subr.bf16.mxu0 0
          %2287 = vmatpush1.bf16.xpose.msra.mxu0 0
          %2288 = vmatprep.subr.bf16.mxu0 0
          %2289 = vmatpush1.bf16.xpose.msra.mxu0 0
          %2290 = vmatprep.subr.bf16.mxu0 0
          %2291 = vmatpush1.bf16.xpose.msra.mxu0 0
          %2292 = vmatprep.subr.bf16.mxu0 0
          %2293 = vmatpush1.bf16.xpose.msra.mxu0 0
          %2294 = vmatprep.subr.bf16.mxu0 0
          %2295 = vmatpush1.bf16.xpose.msra.mxu0 0
          %2296 = vmatprep.subr.bf16.mxu0 0
          %2297 = vmatpush1.bf16.xpose.msra.mxu0 0
          %2298 = vmatprep.subr.bf16.mxu0 0
          %2299 = vmatpush1.bf16.xpose.msra.mxu0 0
          %2300 = vmatprep.subr.bf16.mxu0 0
          %2301 = vmatpush1.bf16.xpose.msra.mxu0 0
          %2302 = vmatprep.subr.bf16.mxu0 0
          %2303 = vmatpush1.bf16.xpose.msra.mxu0 0
          %2304 = vmatprep.subr.bf16.mxu0 0
          %2305 = vmatpush1.bf16.xpose.msra.mxu0 0
          %2306 = vmatprep.subr.bf16.mxu0 0
          %2307 = vmatpush1.bf16.xpose.msra.mxu0 0
          %2308 = vmatprep.subr.bf16.mxu0 0
          %2309 = vmatpush1.bf16.xpose.msra.mxu0 0
          %2310 = vmatprep.subr.bf16.mxu0 0
          %2311 = vmatpush1.bf16.xpose.msra.mxu0 0
          %2312 = vmatprep.subr.bf16.mxu0 0
          %2313 = vmatpush1.bf16.xpose.msra.mxu0 0
          %2314 = vmatprep.mubr.bf16.mxu0 %v1791
          %2315 = vmatmul.mubr.bf16.gmra.mrb[0].mxu0 %v1790
          %v2316 = vpop.f32.mrb[0].mxu0
          %v2317 = vadd.f32 %v2269, %v2316
          %v2318 = vpop.f32.mrb[0].mxu0
          %v2319 = vpop.f32.mrb[0].mxu0
          %v2320 = vadd.f32 %v2272, %v2319
          %v2321 = vpop.f32.mrb[0].mxu0
          %2322 = vmatprep.mubr.bf16.mxu0 %v1815
          %2323 = vmatmul.mubr.bf16.gmra.mrb[0].mxu0 %v1814
          %v2324 = vpop.f32.mrb[0].mxu0
          %v2325 = vadd.f32 %v2277, %v2324
          %v2326 = vpop.f32.mrb[0].mxu0
          %v2327 = vpop.f32.mrb[0].mxu0
          %v2328 = vpop.f32.mrb[0].mxu0
          %2329 = vdwg.mxu0
          %2330 = vmatprep.subr.bf16.mxu0 %v1961
          %2331 = vmatpush1.bf16.xpose.msra.mxu0 %v1960
          %2332 = vmatprep.subr.bf16.mxu0 0
          %2333 = vmatpush1.bf16.xpose.msra.mxu0 0
          %2334 = vmatprep.subr.bf16.mxu0 0
          %2335 = vmatpush1.bf16.xpose.msra.mxu0 0
          %2336 = vmatprep.subr.bf16.mxu0 0
          %2337 = vmatpush1.bf16.xpose.msra.mxu0 0
          %2338 = vmatprep.subr.bf16.mxu0 0
          %2339 = vmatpush1.bf16.xpose.msra.mxu0 0
          %2340 = vmatprep.subr.bf16.mxu0 0
          %2341 = vmatpush1.bf16.xpose.msra.mxu0 0
          %2342 = vmatprep.subr.bf16.mxu0 0
          %2343 = vmatpush1.bf16.xpose.msra.mxu0 0
          %2344 = vmatprep.subr.bf16.mxu0 0
          %2345 = vmatpush1.bf16.xpose.msra.mxu0 0
          %2346 = vmatprep.subr.bf16.mxu0 0
          %2347 = vmatpush1.bf16.xpose.msra.mxu0 0
          %2348 = vmatprep.subr.bf16.mxu0 0
          %2349 = vmatpush1.bf16.xpose.msra.mxu0 0
          %2350 = vmatprep.subr.bf16.mxu0 0
          %2351 = vmatpush1.bf16.xpose.msra.mxu0 0
          %2352 = vmatprep.subr.bf16.mxu0 0
          %2353 = vmatpush1.bf16.xpose.msra.mxu0 0
          %2354 = vmatprep.subr.bf16.mxu0 0
          %2355 = vmatpush1.bf16.xpose.msra.mxu0 0
          %2356 = vmatprep.subr.bf16.mxu0 0
          %2357 = vmatpush1.bf16.xpose.msra.mxu0 0
          %2358 = vmatprep.subr.bf16.mxu0 0
          %2359 = vmatpush1.bf16.xpose.msra.mxu0 0
          %2360 = vmatprep.subr.bf16.mxu0 0
          %2361 = vmatpush1.bf16.xpose.msra.mxu0 0
          %2362 = vmatprep.mubr.bf16.mxu0 %v1793
          %2363 = vmatmul.mubr.bf16.gmra.mrb[0].mxu0 %v1792
          %v2364 = vpop.f32.mrb[0].mxu0
          %v2365 = vadd.f32 %v2317, %v2364
          %v2366 = vpop.f32.mrb[0].mxu0
          %v2367 = vpop.f32.mrb[0].mxu0
          %v2368 = vadd.f32 %v2320, %v2367
          %v2369 = vpop.f32.mrb[0].mxu0
          %2370 = vmatprep.mubr.bf16.mxu0 %v1817
          %2371 = vmatmul.mubr.bf16.gmra.mrb[0].mxu0 %v1816
          %v2372 = vpop.f32.mrb[0].mxu0
          %v2373 = vadd.f32 %v2325, %v2372
          %v2374 = vpop.f32.mrb[0].mxu0
          %v2375 = vpop.f32.mrb[0].mxu0
          %v2376 = vpop.f32.mrb[0].mxu0
          %2377 = vdwg.mxu0
          %2378 = vmatprep.subr.bf16.mxu0 %v1963
          %2379 = vmatpush1.bf16.xpose.msra.mxu0 %v1962
          %2380 = vmatprep.subr.bf16.mxu0 0
          %2381 = vmatpush1.bf16.xpose.msra.mxu0 0
          %2382 = vmatprep.subr.bf16.mxu0 0
          %2383 = vmatpush1.bf16.xpose.msra.mxu0 0
          %2384 = vmatprep.subr.bf16.mxu0 0
          %2385 = vmatpush1.bf16.xpose.msra.mxu0 0
          %2386 = vmatprep.subr.bf16.mxu0 0
          %2387 = vmatpush1.bf16.xpose.msra.mxu0 0
          %2388 = vmatprep.subr.bf16.mxu0 0
          %2389 = vmatpush1.bf16.xpose.msra.mxu0 0
          %2390 = vmatprep.subr.bf16.mxu0 0
          %2391 = vmatpush1.bf16.xpose.msra.mxu0 0
          %2392 = vmatprep.subr.bf16.mxu0 0
          %2393 = vmatpush1.bf16.xpose.msra.mxu0 0
          %2394 = vmatprep.subr.bf16.mxu0 0
          %2395 = vmatpush1.bf16.xpose.msra.mxu0 0
          %2396 = vmatprep.subr.bf16.mxu0 0
          %2397 = vmatpush1.bf16.xpose.msra.mxu0 0
          %2398 = vmatprep.subr.bf16.mxu0 0
          %2399 = vmatpush1.bf16.xpose.msra.mxu0 0
          %2400 = vmatprep.subr.bf16.mxu0 0
          %2401 = vmatpush1.bf16.xpose.msra.mxu0 0
          %2402 = vmatprep.subr.bf16.mxu0 0
          %2403 = vmatpush1.bf16.xpose.msra.mxu0 0
          %2404 = vmatprep.subr.bf16.mxu0 0
          %2405 = vmatpush1.bf16.xpose.msra.mxu0 0
          %2406 = vmatprep.subr.bf16.mxu0 0
          %2407 = vmatpush1.bf16.xpose.msra.mxu0 0
          %2408 = vmatprep.subr.bf16.mxu0 0
          %2409 = vmatpush1.bf16.xpose.msra.mxu0 0
          %2410 = vmatprep.mubr.bf16.mxu0 %v1795
          %2411 = vmatmul.mubr.bf16.gmra.mrb[0].mxu0 %v1794
          %v2412 = vpop.f32.mrb[0].mxu0
          %v2413 = vadd.f32 %v2365, %v2412
          %v2414 = vpop.f32.mrb[0].mxu0
          %v2415 = vpop.f32.mrb[0].mxu0
          %v2416 = vadd.f32 %v2368, %v2415
          %v2417 = vpop.f32.mrb[0].mxu0
          %2418 = vmatprep.mubr.bf16.mxu0 %v1819
          %2419 = vmatmul.mubr.bf16.gmra.mrb[0].mxu0 %v1818
          %v2420 = vpop.f32.mrb[0].mxu0
          %v2421 = vadd.f32 %v2373, %v2420
          %v2422 = vpop.f32.mrb[0].mxu0
          %v2423 = vpop.f32.mrb[0].mxu0
          %v2424 = vpop.f32.mrb[0].mxu0
          %2425 = vdwg.mxu0
          %2426 = vmatprep.subr.bf16.mxu0 %v1965
          %2427 = vmatpush1.bf16.xpose.msra.mxu0 %v1964
          %2428 = vmatprep.subr.bf16.mxu0 0
          %2429 = vmatpush1.bf16.xpose.msra.mxu0 0
          %2430 = vmatprep.subr.bf16.mxu0 0
          %2431 = vmatpush1.bf16.xpose.msra.mxu0 0
          %2432 = vmatprep.subr.bf16.mxu0 0
          %2433 = vmatpush1.bf16.xpose.msra.mxu0 0
          %2434 = vmatprep.subr.bf16.mxu0 0
          %2435 = vmatpush1.bf16.xpose.msra.mxu0 0
          %2436 = vmatprep.subr.bf16.mxu0 0
          %2437 = vmatpush1.bf16.xpose.msra.mxu0 0
          %2438 = vmatprep.subr.bf16.mxu0 0
          %2439 = vmatpush1.bf16.xpose.msra.mxu0 0
          %2440 = vmatprep.subr.bf16.mxu0 0
          %2441 = vmatpush1.bf16.xpose.msra.mxu0 0
          %2442 = vmatprep.subr.bf16.mxu0 0
          %2443 = vmatpush1.bf16.xpose.msra.mxu0 0
          %2444 = vmatprep.subr.bf16.mxu0 0
          %2445 = vmatpush1.bf16.xpose.msra.mxu0 0
          %2446 = vmatprep.subr.bf16.mxu0 0
          %2447 = vmatpush1.bf16.xpose.msra.mxu0 0
          %2448 = vmatprep.subr.bf16.mxu0 0
          %2449 = vmatpush1.bf16.xpose.msra.mxu0 0
          %2450 = vmatprep.subr.bf16.mxu0 0
          %2451 = vmatpush1.bf16.xpose.msra.mxu0 0
          %2452 = vmatprep.subr.bf16.mxu0 0
          %2453 = vmatpush1.bf16.xpose.msra.mxu0 0
          %2454 = vmatprep.subr.bf16.mxu0 0
          %2455 = vmatpush1.bf16.xpose.msra.mxu0 0
          %2456 = vmatprep.subr.bf16.mxu0 0
          %2457 = vmatpush1.bf16.xpose.msra.mxu0 0
          %2458 = vmatprep.mubr.bf16.mxu0 %v1797
          %2459 = vmatmul.mubr.bf16.gmra.mrb[0].mxu0 %v1796
          %v2460 = vpop.f32.mrb[0].mxu0
          %v2461 = vadd.f32 %v2413, %v2460
          %v2462 = vpop.f32.mrb[0].mxu0
          %v2463 = vpop.f32.mrb[0].mxu0
          %v2464 = vadd.f32 %v2416, %v2463
          %v2465 = vpop.f32.mrb[0].mxu0
          %2466 = vmatprep.mubr.bf16.mxu0 %v1821
          %2467 = vmatmul.mubr.bf16.gmra.mrb[0].mxu0 %v1820
          %v2468 = vpop.f32.mrb[0].mxu0
          %v2469 = vadd.f32 %v2421, %v2468
          %v2470 = vpop.f32.mrb[0].mxu0
          %v2471 = vpop.f32.mrb[0].mxu0
          %v2472 = vpop.f32.mrb[0].mxu0
          %2473 = vdwg.mxu0
          %2474 = vmatprep.subr.bf16.mxu0 %v1967
          %2475 = vmatpush1.bf16.xpose.msra.mxu0 %v1966
          %2476 = vmatprep.subr.bf16.mxu0 0
          %2477 = vmatpush1.bf16.xpose.msra.mxu0 0
          %2478 = vmatprep.subr.bf16.mxu0 0
          %2479 = vmatpush1.bf16.xpose.msra.mxu0 0
          %2480 = vmatprep.subr.bf16.mxu0 0
          %2481 = vmatpush1.bf16.xpose.msra.mxu0 0
          %2482 = vmatprep.subr.bf16.mxu0 0
          %2483 = vmatpush1.bf16.xpose.msra.mxu0 0
          %2484 = vmatprep.subr.bf16.mxu0 0
          %2485 = vmatpush1.bf16.xpose.msra.mxu0 0
          %2486 = vmatprep.subr.bf16.mxu0 0
          %2487 = vmatpush1.bf16.xpose.msra.mxu0 0
          %2488 = vmatprep.subr.bf16.mxu0 0
          %2489 = vmatpush1.bf16.xpose.msra.mxu0 0
          %2490 = vmatprep.subr.bf16.mxu0 0
          %2491 = vmatpush1.bf16.xpose.msra.mxu0 0
          %2492 = vmatprep.subr.bf16.mxu0 0
          %2493 = vmatpush1.bf16.xpose.msra.mxu0 0
          %2494 = vmatprep.subr.bf16.mxu0 0
          %2495 = vmatpush1.bf16.xpose.msra.mxu0 0
          %2496 = vmatprep.subr.bf16.mxu0 0
          %2497 = vmatpush1.bf16.xpose.msra.mxu0 0
          %2498 = vmatprep.subr.bf16.mxu0 0
          %2499 = vmatpush1.bf16.xpose.msra.mxu0 0
          %2500 = vmatprep.subr.bf16.mxu0 0
          %2501 = vmatpush1.bf16.xpose.msra.mxu0 0
          %2502 = vmatprep.subr.bf16.mxu0 0
          %2503 = vmatpush1.bf16.xpose.msra.mxu0 0
          %2504 = vmatprep.subr.bf16.mxu0 0
          %2505 = vmatpush1.bf16.xpose.msra.mxu0 0
          %2506 = vmatprep.mubr.bf16.mxu0 %v1799
          %2507 = vmatmul.mubr.bf16.gmra.mrb[0].mxu0 %v1798
          %v2508 = vpop.f32.mrb[0].mxu0
          %v2509 = vadd.f32 %v2461, %v2508
          %v2510 = vpop.f32.mrb[0].mxu0
          %v2511 = vpop.f32.mrb[0].mxu0
          %v2512 = vadd.f32 %v2464, %v2511
          %v2513 = vpop.f32.mrb[0].mxu0
          %2514 = vmatprep.mubr.bf16.mxu0 %v1823
          %2515 = vmatmul.mubr.bf16.gmra.mrb[0].mxu0 %v1822
          %v2516 = vpop.f32.mrb[0].mxu0
          %v2517 = vadd.f32 %v2469, %v2516
          %v2518 = vpop.f32.mrb[0].mxu0
          %v2519 = vpop.f32.mrb[0].mxu0
          %v2520 = vpop.f32.mrb[0].mxu0
          %2521 = vdwg.mxu0
          %2522 = vmatprep.subr.bf16.mxu0 %v1969
          %2523 = vmatpush1.bf16.xpose.msra.mxu0 %v1968
          %2524 = vmatprep.subr.bf16.mxu0 0
          %2525 = vmatpush1.bf16.xpose.msra.mxu0 0
          %2526 = vmatprep.subr.bf16.mxu0 0
          %2527 = vmatpush1.bf16.xpose.msra.mxu0 0
          %2528 = vmatprep.subr.bf16.mxu0 0
          %2529 = vmatpush1.bf16.xpose.msra.mxu0 0
          %2530 = vmatprep.subr.bf16.mxu0 0
          %2531 = vmatpush1.bf16.xpose.msra.mxu0 0
          %2532 = vmatprep.subr.bf16.mxu0 0
          %2533 = vmatpush1.bf16.xpose.msra.mxu0 0
          %2534 = vmatprep.subr.bf16.mxu0 0
          %2535 = vmatpush1.bf16.xpose.msra.mxu0 0
          %2536 = vmatprep.subr.bf16.mxu0 0
          %2537 = vmatpush1.bf16.xpose.msra.mxu0 0
          %2538 = vmatprep.subr.bf16.mxu0 0
          %2539 = vmatpush1.bf16.xpose.msra.mxu0 0
          %2540 = vmatprep.subr.bf16.mxu0 0
          %2541 = vmatpush1.bf16.xpose.msra.mxu0 0
          %2542 = vmatprep.subr.bf16.mxu0 0
          %2543 = vmatpush1.bf16.xpose.msra.mxu0 0
          %2544 = vmatprep.subr.bf16.mxu0 0
          %2545 = vmatpush1.bf16.xpose.msra.mxu0 0
          %2546 = vmatprep.subr.bf16.mxu0 0
          %2547 = vmatpush1.bf16.xpose.msra.mxu0 0
          %2548 = vmatprep.subr.bf16.mxu0 0
          %2549 = vmatpush1.bf16.xpose.msra.mxu0 0
          %2550 = vmatprep.subr.bf16.mxu0 0
          %2551 = vmatpush1.bf16.xpose.msra.mxu0 0
          %2552 = vmatprep.subr.bf16.mxu0 0
          %2553 = vmatpush1.bf16.xpose.msra.mxu0 0
          %2554 = vmatprep.mubr.bf16.mxu0 %v1801
          %2555 = vmatmul.mubr.bf16.gmra.mrb[0].mxu0 %v1800
          %v2556 = vpop.f32.mrb[0].mxu0
          %v2557 = vadd.f32 %v2509, %v2556
          %v2558 = vpop.f32.mrb[0].mxu0
          %v2559 = vpop.f32.mrb[0].mxu0
          %v2560 = vadd.f32 %v2512, %v2559
          %v2561 = vpop.f32.mrb[0].mxu0
          %2562 = vmatprep.mubr.bf16.mxu0 %v1825
          %2563 = vmatmul.mubr.bf16.gmra.mrb[0].mxu0 %v1824
          %v2564 = vpop.f32.mrb[0].mxu0
          %v2565 = vadd.f32 %v2517, %v2564
          %v2566 = vpop.f32.mrb[0].mxu0
          %v2567 = vpop.f32.mrb[0].mxu0
          %v2568 = vpop.f32.mrb[0].mxu0
          %2569 = vdwg.mxu0
          %v2570 = vsel %vm1226, %v2557, -inf
          %2571 = vmax.xlane.f32.xlu0 %v2570
          %v2572 = vpop.xlane.xlu0 %2571
          %v2573 = vsel %vm1226, %v2560, -inf
          %2574 = vmax.xlane.f32.xlu0 %v2573
          %v2575 = vpop.xlane.xlu0 %2574
          %vm2576 = vcmask 76800
          %v2577 = vsel %vm2576, %v2565, -inf
          %2578 = vmax.xlane.f32.xlu0 %v2577
          %v2579 = vpop.xlane.xlu0 %2578
          %v2580 = vlaneseq
          %v2581 = vand.u32 %v2580, 127
          %vm2582 = vcmp.ge.f32.partialorder %v2557, %v2572
          %vm2583 = vcmp.ge.f32.partialorder %v2560, %v2575
          %vm2584 = vcmp.ge.f32.partialorder %v2565, %v2579
          %v2585 = vsel %vm2582, %v2581, 10
          %v2586 = vsel %vm2583, %v2581, 10
          %v2587 = vsel %vm2584, %v2581, 10
          %v2588 = vsel %vm1226, %v2585, 2147483647
          %v2589 = vand.u32 %v2588, 65535
          %v2590 = vshra.s32 %v2588, 16
          %v2591 = vcvt.s32.f32 %v2589
          %v2592 = vcvt.s32.f32 %v2590
          %2593 = vmin.xlane.f32.xlu0 %v2592
          %v2594 = vpop.xlane.xlu0 %2593
          %vm2595 = vcmp.eq.f32.partialorder %v2592, %v2594
          %v2596 = vsel %vm2595, %v2591, inf
          %2597 = vmin.xlane.f32.xlu0 %v2596
          %v2598 = vpop.xlane.xlu0 %2597
          %v2599 = vcvt.f32.s32 %v2598
          %v2600 = vcvt.f32.s32 %v2594
          %v2601 = vshll.u32 %v2600, 16
          %v2602 = vadd.s32 %v2601, %v2599
          %v2603 = vsel %vm1226, %v2586, 2147483647
          %v2604 = vand.u32 %v2603, 65535
          %v2605 = vshra.s32 %v2603, 16
          %v2606 = vcvt.s32.f32 %v2604
          %v2607 = vcvt.s32.f32 %v2605
          %2608 = vmin.xlane.f32.xlu0 %v2607
          %v2609 = vpop.xlane.xlu0 %2608
          %vm2610 = vcmp.eq.f32.partialorder %v2607, %v2609
          %v2611 = vsel %vm2610, %v2606, inf
          %2612 = vmin.xlane.f32.xlu0 %v2611
          %v2613 = vpop.xlane.xlu0 %2612
          %v2614 = vcvt.f32.s32 %v2613
          %v2615 = vcvt.f32.s32 %v2609
          %v2616 = vshll.u32 %v2615, 16
          %v2617 = vadd.s32 %v2616, %v2614
          %v2618 = vsel %vm2576, %v2587, 2147483647
          %v2619 = vand.u32 %v2618, 65535
          %v2620 = vshra.s32 %v2618, 16
          %v2621 = vcvt.s32.f32 %v2619
          %v2622 = vcvt.s32.f32 %v2620
          %2623 = vmin.xlane.f32.xlu0 %v2622
          %v2624 = vpop.xlane.xlu0 %2623
          %vm2625 = vcmp.eq.f32.partialorder %v2622, %v2624
          %v2626 = vsel %vm2625, %v2621, inf
          %2627 = vmin.xlane.f32.xlu0 %v2626
          %v2628 = vpop.xlane.xlu0 %2627
          %v2629 = vcvt.f32.s32 %v2628
          %v2630 = vcvt.f32.s32 %v2624
          %v2631 = vshll.u32 %v2630, 16
          %v2632 = vadd.s32 %v2631, %v2629
          %v2633 = vld [vmem:[%s4] sm:$0xff]
          %v2634 = vld [vmem:[%s4 + $0x8] sm:$0xff]
          %v2635 = vld [vmem:[%s4 + $0x10] sm:$0xf]
          %vm2636 = vcmp.eq.s32.totalorder %v2602, %v2633
          %vm2637 = vcmp.eq.s32.totalorder %v2617, %v2634
          %vm2638 = vcmp.eq.s32.totalorder %v2632, %v2635
          %v2639 = vsel %vm2636, 1, 0
          %v2640 = vsel %vm2637, 1, 0
          %v2641 = vsel %vm2638, 1, 0
          %vm2642 = vcmask 7168
          %v2643 = vsel %vm2642, %v2639, 0
          %v2644 = vsel %vm2642, %v2640, 0
          %vm2645 = vcmask 3072
          %v2646 = vsel %vm2645, %v2641, 0
          %v2647 = vadd.s32 %v2643, %v2644
          %v2648 = vadd.s32 %v2647, %v2646
          %v2649 = vand.u32 %v2648, 65535
          %v2650 = vshrl.u32 %v2648, 16
          %v2651 = vcvt.s32.f32 %v2649
          %v2652 = vcvt.s32.f32 %v2650
          %2653 = vadd.xlane.f32.xlu0 %v2651
          %v2654 = vpop.xlane.xlu0 %2653
          %2655 = vadd.xlane.f32.xlu0 %v2652
          %v2656 = vpop.xlane.xlu0 %2655
          %v2657 = vcvt.f32.s32 %v2654
          %v2658 = vcvt.f32.s32 %v2656
          %v2659 = vshll.u32 %v2658, 16
          %v2660 = vadd.s32 %v2659, %v2657
          %v2661 = vrot.slane %v2660, 4
          %v2662 = vadd.s32 %v2660, %v2661
          %v2663 = vrot.slane %v2662, 2
          %v2664 = vadd.s32 %v2662, %v2663
          %v2665 = vrot.slane %v2664, 1
          %v2666 = vadd.s32 %v2664, %v2665
          %s2667 = vtos %v2666
          %v2668 = vstv %s2667
          %2669 = vst [vmem:[%s341] sm:$0xff] %v2668
        $region60: #{tpu_custom_call.1} parent=39 // pred_fallthru
          _
        %s2670 = sand.u32 %s152, 1
        %s2671 = scalar_lea.sflag [#allocation4], %s2670
        %s2672 = sand.u32 %s152, 1
        %s2673 = smul.addr %s2672, 8
        %s2674 = scalar_lea.vmem [#allocation10], %s2673
        %s2675 = sand.u32 %s178, 1
        %s2676 = scalar_lea.sflag [#allocation12], %s2675
        %s2677 = sand.u32 %s178, 1
        %s2678 = smul.addr %s2677, 8
        %s2679 = scalar_lea.vmem [#allocation11], %s2678
        // Predicated region
        $region61: #{tpu_custom_call.1} parent=39 // pred_check
          %p2680 = pneg %p162
        $region62: #{tpu_custom_call.1} parent=39 // pred_check_branch
          %2682 = sbr.rel (%p2680) target = $region64
        $region63: #{tpu_custom_call.1} parent=39 // pred_region
          %s2684 = ssub.s32 128, 128
          %2685 = vsyncadd %s2671, %s2684
          %s2686 = smul.addr %s29, 128
          %s2687 = scalar_lea.hbm %s5, %s2686
          %s2689 = sshll.u32 %s2674, 4
          %s2690 = int_to_ptr.vmem [resolvable:$true] %s2689
          %2692 = dma.vmem_to_hbm [thread:$0]  %s2690, 128, %s2687, %s2671
        $region64: #{tpu_custom_call.1} parent=39 // pred_fallthru
          _
        // Predicated region
        $region65: #{tpu_custom_call.1} parent=39 // pred_check
          %p2693 = pneg %p188
        $region66: #{tpu_custom_call.1} parent=39 // pred_check_branch
          %2695 = sbr.rel (%p2693) target = $region68
        $region67: #{tpu_custom_call.1} parent=39 // pred_region
          %s2697 = ssub.s32 128, 128
          %2698 = vsyncadd %s2676, %s2697
          %s2699 = smul.addr %s29, 128
          %s2700 = scalar_lea.hbm %s6, %s2699
          %s2702 = sshll.u32 %s2679, 4
          %s2703 = int_to_ptr.vmem [resolvable:$true] %s2702
          %2705 = dma.vmem_to_hbm [thread:$0]  %s2703, 128, %s2700, %s2676
        $region68: #{tpu_custom_call.1} parent=39 // pred_fallthru
          _
      $region40: #{tpu_custom_call.1} parent=5 // pred_fallthru
        _
      %p2706 = scmp.le.s32.totalorder 2, %s24
      // Predicated region
      $region69: #{tpu_custom_call.1} parent=5 // pred_check
        %p2707 = pneg %p2706
      $region70: #{tpu_custom_call.1} parent=5 // pred_check_branch
        %2709 = sbr.rel (%p2707) target = $region72
      $region71: #{tpu_custom_call.1} parent=5 // pred_region
        %s2710 = ssub.s32 %s24, 2
        // Predicated region
        $region73: #{tpu_custom_call.1} parent=71 // pred_check
          %p2711 = pneg %p168
        $region74: #{tpu_custom_call.1} parent=71 // pred_check_branch
          %2713 = sbr.rel (%p2711) target = $region76
        $region75: #{tpu_custom_call.1} parent=71 // pred_region
          %s2714 = sand.u32 %s153, 1
          %s2715 = scalar_lea.sflag [#allocation4], %s2714
          %s2716 = sand.u32 %s153, 1
          %s2717 = smul.addr %s2716, 8
          %s2718 = scalar_lea.vmem [#allocation10], %s2717
          %2719 = dma.done %s2715, 128
        $region76: #{tpu_custom_call.1} parent=71 // pred_fallthru
          _
        // Predicated region
        $region77: #{tpu_custom_call.1} parent=71 // pred_check
          %p2720 = pneg %p194
        $region78: #{tpu_custom_call.1} parent=71 // pred_check_branch
          %2722 = sbr.rel (%p2720) target = $region80
        $region79: #{tpu_custom_call.1} parent=71 // pred_region
          %s2723 = sand.u32 %s179, 1
          %s2724 = scalar_lea.sflag [#allocation12], %s2723
          %s2725 = sand.u32 %s179, 1
          %s2726 = smul.addr %s2725, 8
          %s2727 = scalar_lea.vmem [#allocation11], %s2726
          %2728 = dma.done %s2724, 128
        $region80: #{tpu_custom_call.1} parent=71 // pred_fallthru
          _
      $region72: #{tpu_custom_call.1} parent=5 // pred_fallthru
        _
    $region6: #{tpu_custom_call.1} parent=1 // loop_footer
      %s28 = sadd.s32 1, %s24
    $region7: #{tpu_custom_call.1} parent=1 // loop_footer_branch
      %23 = sbr.rel target = $region3
    $region8: #{tpu_custom_call.1} parent=1 // loop_exit
      _
    %2729 = vsyncpa [#allocation3], 1
    %s2730 = scalar_lea.sflag [#allocation3], 1
    %2731 = vsyncpa %s2730, 1
    %2732 = vsyncpa [#allocation6], 1
    %s2733 = scalar_lea.sflag [#allocation6], 1
    %2734 = vsyncpa %s2733, 1
    %2735 = vsyncpa [#allocation9], 1
    %2736 = vsyncpa [#allocation4], 1
    %s2737 = scalar_lea.sflag [#allocation4], 1
    %2738 = vsyncpa %s2737, 1
    %2739 = vsyncpa [#allocation12], 1
    %s2740 = scalar_lea.sflag [#allocation12], 1
    %2741 = vsyncpa %s2740, 1

</llo_original>
